<compile_context>
chip_gen: v5e
topology: v5e:2x2
jax: 0.10.0
libtpu: 0.0.40
codegen_flags: <defaults>
</compile_context>

<pallas_src>
import functools

import jax
import jax.numpy as jnp
from jax import lax
from jax.experimental import pallas as pl
from jax.experimental.pallas import tpu as pltpu

# Padded, (8, 128)-aligned working shapes.
HP = 128     # padded hidden size (one full lane group per gate)
INP = 128    # padded input feature dim
BP = 8       # padded batch (one full sublane tile)
OUTP = 128   # padded output dim (lane-dense final store)


def _lstm_nn_kernel(slab128_ref, slab512_ref, whh_ref, out_ref, gx_scr, *, seq):
    """slab128: [obs_p (Np,128) | w1_p (128,128) | w2_p (128,128) | b1 (8,128) | b2 (8,128)]
       slab512: [W_ih_p (128,512) | b_lstm (8,512)]
       whh_ref: W_hh_p (128,512) in bfloat16."""
    Np = seq * BP
    H = HP
    G = 4 * HP

    # ---- Phase 1 (off the serial path) -------------------------------------
    # Input projection + fused LSTM bias for ALL timesteps in one batched MXU
    # matmul over Np rows.
    x = slab128_ref[0:Np, :]                       # (Np, INP) padded obs
    wih = slab512_ref[0:INP, :]                    # (INP, G)
    b_lstm = slab512_ref[INP:INP + 1, :]           # (1, G), broadcasts over rows
    gx_scr[...] = jnp.dot(x, wih, preferred_element_type=jnp.float32) + b_lstm

    # ---- Phase 2: the recurrence -------------------------------------------
    # Only h @ W_hh (bf16 inputs, f32 accumulation) is on the serial critical
    # path.  `seq` is a static Python int, so this loop fully unrolls at trace
    # time; all slice offsets are static and (8,128)-aligned.
    h = jnp.zeros((BP, H), jnp.float32)
    c = jnp.zeros((BP, H), jnp.float32)
    hs = []
    for t in range(seq):
        r0 = t * BP
        gates = gx_scr[r0:r0 + BP, :] + jnp.dot(
            h.astype(jnp.bfloat16), whh_ref[...],
            preferred_element_type=jnp.float32)
        # PyTorch gate order: i, f, g, o.  Each slice is one full 128-lane group.
        i_g = jax.nn.sigmoid(gates[:, 0 * H:1 * H])
        f_g = jax.nn.sigmoid(gates[:, 1 * H:2 * H])
        g_g = jnp.tanh(gates[:, 2 * H:3 * H])
        o_g = jax.nn.sigmoid(gates[:, 3 * H:4 * H])
        c = f_g * c + i_g * g_g
        h = o_g * jnp.tanh(c)
        hs.append(h)                               # (8,128) f32 = one vreg
    hs_all = jnp.concatenate(hs, axis=0)           # (Np, H), stays on-core

    # ---- Phase 3 (off the serial path) -------------------------------------
    # fc head: Linear -> ReLU -> (dropout=identity) -> Linear -> Tanh ->
    # (dropout=identity), batched over all rows; one lane-dense output store.
    w1 = slab128_ref[Np:Np + H, :]
    w2 = slab128_ref[Np + H:Np + 2 * H, :]
    b1 = slab128_ref[Np + 2 * H:Np + 2 * H + 1, :]
    b2 = slab128_ref[Np + 2 * H + 8:Np + 2 * H + 9, :]
    y1 = jnp.maximum(
        jnp.dot(hs_all, w1, preferred_element_type=jnp.float32) + b1, 0.0)
    y2 = jnp.tanh(
        jnp.dot(y1, w2, preferred_element_type=jnp.float32) + b2)
    out_ref[...] = y2.astype(out_ref.dtype)


def _pad_gate_cols(w, h, hp):
    """(rows, 4*h) -> (rows, 4*hp): zero-pad each of the 4 gate blocks to hp lanes."""
    blocks = [jnp.pad(w[:, k * h:(k + 1) * h], ((0, 0), (0, hp - h)))
              for k in range(4)]
    return jnp.concatenate(blocks, axis=1)


def lstm_nn_forward(obs, params):
    """obs: (seq, batch, in_dim) float32.  Returns (seq, batch, out_dim)
    (squeezed to (batch, out_dim) when seq == 1, mimicking torch .squeeze(0))."""
    w_ih, w_hh, b_lstm, w1, b1, w2, b2 = params
    seq, B, in_dim = obs.shape
    H = w_hh.shape[0]
    out_dim = w2.shape[1]
    Np = seq * BP
    f32 = jnp.float32

    # ---- Host-side padding / packing to (8,128)-aligned slabs --------------
    # Padded obs: batch 2->8, features in_dim->128 (zero rows/lanes).
    obs_p = jnp.zeros((seq, BP, INP), f32).at[:, :B, :in_dim].set(obs)
    obs_p = obs_p.reshape(Np, INP)

    # LSTM input weights + bias (512-lane slab).  Padded gate lanes get zero
    # weights and zero bias -> padded c/h lanes stay exactly 0 in the kernel.
    wih_p = jnp.zeros((INP, 4 * HP), f32).at[:in_dim, :].set(
        _pad_gate_cols(w_ih, H, HP))
    b_p = _pad_gate_cols(b_lstm.reshape(1, 4 * H), H, HP)        # (1, 4*HP)
    slab512 = jnp.concatenate([wih_p, jnp.tile(b_p, (8, 1))], axis=0)  # (136, 512)

    # Recurrent weights, pre-cast to bf16 (the only serial matmul).
    whh_p = jnp.zeros((HP, 4 * HP), f32).at[:H, :].set(_pad_gate_cols(w_hh, H, HP))
    whh_bf = whh_p.astype(jnp.bfloat16)

    # Head weights + biases + obs share the 128-lane slab.
    w1_p = jnp.zeros((HP, HP), f32).at[:H, :H].set(w1)
    w2_p = jnp.zeros((HP, OUTP), f32).at[:H, :out_dim].set(w2)
    b1_p = jnp.zeros((1, HP), f32).at[0, :H].set(b1)
    b2_p = jnp.zeros((1, OUTP), f32).at[0, :out_dim].set(b2)
    slab128 = jnp.concatenate(
        [obs_p, w1_p, w2_p, jnp.tile(b1_p, (8, 1)), jnp.tile(b2_p, (8, 1))],
        axis=0)                                                  # (Np+272, 128)

    kernel = functools.partial(_lstm_nn_kernel, seq=seq)
    vmem = pl.BlockSpec(memory_space=pltpu.MemorySpace.VMEM)

    out_p = pl.pallas_call(
        kernel,
        out_shape=jax.ShapeDtypeStruct((Np, OUTP), f32),
        in_specs=[vmem, vmem, vmem],      # 3 input DMAs (was 8)
        out_specs=vmem,                   # single lane-dense writeback
        scratch_shapes=[
            pltpu.VMEM((Np, 4 * HP), f32),    # precomputed x-gates
        ],
    )(slab128, slab512, whh_bf)

    out = out_p.reshape(seq, BP, OUTP)[:, :B, :out_dim]
    # torch .squeeze(0): only squeezes when the leading dim is 1
    if out.shape[0] == 1:
        out = jnp.squeeze(out, axis=0)
    return out


def reference_forward(obs, params):
    """Pure-JAX f32 reference (same math, unpadded) for correctness checking."""
    w_ih, w_hh, b_lstm, w1, b1, w2, b2 = params
    seq, B, _ = obs.shape
    H = w_hh.shape[0]

    def step(carry, x_t):
        h, c = carry
        gates = x_t @ w_ih + h @ w_hh + b_lstm
        i_g = jax.nn.sigmoid(gates[:, 0 * H:1 * H])
        f_g = jax.nn.sigmoid(gates[:, 1 * H:2 * H])
        g_g = jnp.tanh(gates[:, 2 * H:3 * H])
        o_g = jax.nn.sigmoid(gates[:, 3 * H:4 * H])
        c_new = f_g * c + i_g * g_g
        h_new = o_g * jnp.tanh(c_new)
        return (h_new, c_new), h_new

    init = (jnp.zeros((B, H), jnp.float32), jnp.zeros((B, H), jnp.float32))
    _, hs = lax.scan(step, init, obs)                 # (seq, B, H)
    y1 = jnp.maximum(hs @ w1 + b1, 0.0)
    y2 = jnp.tanh(y1 @ w2 + b2)
    if y2.shape[0] == 1:
        y2 = jnp.squeeze(y2, axis=0)
    return y2


def init_params(key, in_dim, hiddens, out_dim):
    """Deterministic parameter init (PyTorch-style uniform ranges).
    Weights stored pre-transposed as (in, out) so kernels compute x @ W."""
    ks = jax.random.split(key, 8)
    H = hiddens
    s = 1.0 / jnp.sqrt(H)
    w_ih = jax.random.uniform(ks[0], (in_dim, 4 * H), jnp.float32, -s, s)
    w_hh = jax.random.uniform(ks[1], (H, 4 * H), jnp.float32, -s, s)
    b_ih = jax.random.uniform(ks[2], (4 * H,), jnp.float32, -s, s)
    b_hh = jax.random.uniform(ks[3], (4 * H,), jnp.float32, -s, s)
    b_lstm = b_ih + b_hh
    w1 = jax.random.uniform(ks[4], (H, H), jnp.float32, -s, s)
    b1 = jax.random.uniform(ks[5], (H,), jnp.float32, -s, s)
    w2 = jax.random.uniform(ks[6], (H, out_dim), jnp.float32, -s, s)
    b2 = jax.random.uniform(ks[7], (out_dim,), jnp.float32, -s, s)
    return (w_ih, w_hh, b_lstm, w1, b1, w2, b2)


if __name__ == "__main__":
    seq, batch, in_dim, hiddens, out_dim = 8, 2, 16, 64, 8

    key = jax.random.PRNGKey(0)
    k_obs, k_params = jax.random.split(key)
    obs = jax.random.normal(k_obs, (seq, batch, in_dim), dtype=jnp.float32)
    params = init_params(k_params, in_dim, hiddens, out_dim)

    out = lstm_nn_forward(obs, params)
    out = jax.block_until_ready(out)

    ref = reference_forward(obs, params)
    assert out.shape == (seq, batch, out_dim), out.shape
    # bf16 h @ W_hh on the recurrence (f32 accumulation) vs. the f32 reference:
    # observed error is O(1e-3); 2e-2 tolerance still catches any structural bug.
    max_err = float(jnp.max(jnp.abs(out - ref)))
    assert jnp.allclose(out, ref, atol=2e-2, rtol=0.0), f"mismatch vs reference, max_err={max_err}"

    print("KERNEL_OK")
</pallas_src>

<mosaic_0001>
module attributes {stable_mosaic.version = 11 : i64} {
  func.func @_lstm_nn_kernel(%arg0: memref<336x128xf32, #tpu.memory_space<vmem>>, %arg1: memref<136x512xf32, #tpu.memory_space<vmem>>, %arg2: memref<128x512xbf16, #tpu.memory_space<vmem>>, %arg3: memref<64x128xf32, #tpu.memory_space<vmem>>, %arg4: memref<64x512xf32, #tpu.memory_space<vmem>>) attributes {dimension_semantics = [], scalar_prefetch = 0 : i64, scratch_operands = 1 : i64, tpu.core_type = #tpu.core_type<tc>} {
    %c0 = arith.constant 0 : index
    %c0_0 = arith.constant 0 : index
    %0 = vector.load %arg0[%c0, %c0_0] : memref<336x128xf32, #tpu.memory_space<vmem>>, vector<64x128xf32>
    %c0_1 = arith.constant 0 : index
    %c0_2 = arith.constant 0 : index
    %1 = vector.load %arg1[%c0_1, %c0_2] : memref<136x512xf32, #tpu.memory_space<vmem>>, vector<128x512xf32>
    %c128 = arith.constant 128 : index
    %c0_3 = arith.constant 0 : index
    %2 = vector.load %arg1[%c128, %c0_3] : memref<136x512xf32, #tpu.memory_space<vmem>>, vector<1x512xf32>
    %cst = arith.constant dense<0.000000e+00> : vector<64x512xf32>
    %3 = tpu.matmul %0, %1, %cst {dimension_numbers = #tpu.dot_dimension_numbers<[1], [0], [0], [1], [0, 0, 1, 1], [], []>} : vector<64x128xf32>, vector<128x512xf32>, vector<64x512xf32> -> vector<64x512xf32>
    %4 = vector.broadcast %2 : vector<1x512xf32> to vector<64x512xf32>
    %5 = arith.addf %3, %4 : vector<64x512xf32>
    %c0_4 = arith.constant 0 : index
    %c0_5 = arith.constant 0 : index
    %6 = vector.load %arg4[%c0_4, %c0_5] : memref<64x512xf32, #tpu.memory_space<vmem>>, vector<64x512xf32>
    tpu.vector_store %arg4[%c0_4, %c0_5], %5 {strides = array<i32>} : memref<64x512xf32, #tpu.memory_space<vmem>>, vector<64x512xf32>,
    %cst_6 = arith.constant 0.000000e+00 : f32
    %7 = vector.broadcast %cst_6 : f32 to vector<8x128xf32>
    %cst_7 = arith.constant 0.000000e+00 : f32
    %8 = vector.broadcast %cst_7 : f32 to vector<8x128xf32>
    %c0_8 = arith.constant 0 : index
    %c0_9 = arith.constant 0 : index
    %9 = vector.load %arg4[%c0_8, %c0_9] : memref<64x512xf32, #tpu.memory_space<vmem>>, vector<8x512xf32>
    %10 = arith.truncf %7 : vector<8x128xf32> to vector<8x128xbf16>
    %c0_10 = arith.constant 0 : index
    %c0_11 = arith.constant 0 : index
    %11 = vector.load %arg2[%c0_10, %c0_11] : memref<128x512xbf16, #tpu.memory_space<vmem>>, vector<128x512xbf16>
    %cst_12 = arith.constant dense<0.000000e+00> : vector<8x512xf32>
    %12 = tpu.matmul %10, %11, %cst_12 {dimension_numbers = #tpu.dot_dimension_numbers<[1], [0], [0], [1], [0, 0, 1, 1], [], []>} : vector<8x128xbf16>, vector<128x512xbf16>, vector<8x512xf32> -> vector<8x512xf32>
    %13 = arith.addf %9, %12 : vector<8x512xf32>
    %14 = vector.extract_strided_slice %13 {offsets = [0, 0], sizes = [8, 128], strides = [1, 1]} : vector<8x512xf32> to vector<8x128xf32>
    %15 = arith.negf %14 : vector<8x128xf32>
    %16 = math.exp %15 : vector<8x128xf32>
    %cst_13 = arith.constant 1.000000e+00 : f32
    %17 = vector.broadcast %cst_13 : f32 to vector<8x128xf32>
    %18 = arith.addf %17, %16 : vector<8x128xf32>
    %19 = arith.divf %17, %18 : vector<8x128xf32>
    %20 = vector.extract_strided_slice %13 {offsets = [0, 128], sizes = [8, 128], strides = [1, 1]} : vector<8x512xf32> to vector<8x128xf32>
    %21 = arith.negf %20 : vector<8x128xf32>
    %22 = math.exp %21 : vector<8x128xf32>
    %cst_14 = arith.constant 1.000000e+00 : f32
    %23 = vector.broadcast %cst_14 : f32 to vector<8x128xf32>
    %24 = arith.addf %23, %22 : vector<8x128xf32>
    %25 = arith.divf %23, %24 : vector<8x128xf32>
    %26 = vector.extract_strided_slice %13 {offsets = [0, 256], sizes = [8, 128], strides = [1, 1]} : vector<8x512xf32> to vector<8x128xf32>
    %27 = math.tanh %26 : vector<8x128xf32>
    %28 = vector.extract_strided_slice %13 {offsets = [0, 384], sizes = [8, 128], strides = [1, 1]} : vector<8x512xf32> to vector<8x128xf32>
    %29 = arith.negf %28 : vector<8x128xf32>
    %30 = math.exp %29 : vector<8x128xf32>
    %cst_15 = arith.constant 1.000000e+00 : f32
    %31 = vector.broadcast %cst_15 : f32 to vector<8x128xf32>
    %32 = arith.addf %31, %30 : vector<8x128xf32>
    %33 = arith.divf %31, %32 : vector<8x128xf32>
    %34 = arith.mulf %25, %8 : vector<8x128xf32>
    %35 = arith.mulf %19, %27 : vector<8x128xf32>
    %36 = arith.addf %34, %35 : vector<8x128xf32>
    %37 = math.tanh %36 : vector<8x128xf32>
    %38 = arith.mulf %33, %37 : vector<8x128xf32>
    %c8 = arith.constant 8 : index
    %c0_16 = arith.constant 0 : index
    %39 = vector.load %arg4[%c8, %c0_16] : memref<64x512xf32, #tpu.memory_space<vmem>>, vector<8x512xf32>
    %40 = arith.truncf %38 : vector<8x128xf32> to vector<8x128xbf16>
    %c0_17 = arith.constant 0 : index
    %c0_18 = arith.constant 0 : index
    %41 = vector.load %arg2[%c0_17, %c0_18] : memref<128x512xbf16, #tpu.memory_space<vmem>>, vector<128x512xbf16>
    %cst_19 = arith.constant dense<0.000000e+00> : vector<8x512xf32>
    %42 = tpu.matmul %40, %41, %cst_19 {dimension_numbers = #tpu.dot_dimension_numbers<[1], [0], [0], [1], [0, 0, 1, 1], [], []>} : vector<8x128xbf16>, vector<128x512xbf16>, vector<8x512xf32> -> vector<8x512xf32>
    %43 = arith.addf %39, %42 : vector<8x512xf32>
    %44 = vector.extract_strided_slice %43 {offsets = [0, 0], sizes = [8, 128], strides = [1, 1]} : vector<8x512xf32> to vector<8x128xf32>
    %45 = arith.negf %44 : vector<8x128xf32>
    %46 = math.exp %45 : vector<8x128xf32>
    %cst_20 = arith.constant 1.000000e+00 : f32
    %47 = vector.broadcast %cst_20 : f32 to vector<8x128xf32>
    %48 = arith.addf %47, %46 : vector<8x128xf32>
    %49 = arith.divf %47, %48 : vector<8x128xf32>
    %50 = vector.extract_strided_slice %43 {offsets = [0, 128], sizes = [8, 128], strides = [1, 1]} : vector<8x512xf32> to vector<8x128xf32>
    %51 = arith.negf %50 : vector<8x128xf32>
    %52 = math.exp %51 : vector<8x128xf32>
    %cst_21 = arith.constant 1.000000e+00 : f32
    %53 = vector.broadcast %cst_21 : f32 to vector<8x128xf32>
    %54 = arith.addf %53, %52 : vector<8x128xf32>
    %55 = arith.divf %53, %54 : vector<8x128xf32>
    %56 = vector.extract_strided_slice %43 {offsets = [0, 256], sizes = [8, 128], strides = [1, 1]} : vector<8x512xf32> to vector<8x128xf32>
    %57 = math.tanh %56 : vector<8x128xf32>
    %58 = vector.extract_strided_slice %43 {offsets = [0, 384], sizes = [8, 128], strides = [1, 1]} : vector<8x512xf32> to vector<8x128xf32>
    %59 = arith.negf %58 : vector<8x128xf32>
    %60 = math.exp %59 : vector<8x128xf32>
    %cst_22 = arith.constant 1.000000e+00 : f32
    %61 = vector.broadcast %cst_22 : f32 to vector<8x128xf32>
    %62 = arith.addf %61, %60 : vector<8x128xf32>
    %63 = arith.divf %61, %62 : vector<8x128xf32>
    %64 = arith.mulf %55, %36 : vector<8x128xf32>
    %65 = arith.mulf %49, %57 : vector<8x128xf32>
    %66 = arith.addf %64, %65 : vector<8x128xf32>
    %67 = math.tanh %66 : vector<8x128xf32>
    %68 = arith.mulf %63, %67 : vector<8x128xf32>
    %c16 = arith.constant 16 : index
    %c0_23 = arith.constant 0 : index
    %69 = vector.load %arg4[%c16, %c0_23] : memref<64x512xf32, #tpu.memory_space<vmem>>, vector<8x512xf32>
    %70 = arith.truncf %68 : vector<8x128xf32> to vector<8x128xbf16>
    %c0_24 = arith.constant 0 : index
    %c0_25 = arith.constant 0 : index
    %71 = vector.load %arg2[%c0_24, %c0_25] : memref<128x512xbf16, #tpu.memory_space<vmem>>, vector<128x512xbf16>
    %cst_26 = arith.constant dense<0.000000e+00> : vector<8x512xf32>
    %72 = tpu.matmul %70, %71, %cst_26 {dimension_numbers = #tpu.dot_dimension_numbers<[1], [0], [0], [1], [0, 0, 1, 1], [], []>} : vector<8x128xbf16>, vector<128x512xbf16>, vector<8x512xf32> -> vector<8x512xf32>
    %73 = arith.addf %69, %72 : vector<8x512xf32>
    %74 = vector.extract_strided_slice %73 {offsets = [0, 0], sizes = [8, 128], strides = [1, 1]} : vector<8x512xf32> to vector<8x128xf32>
    %75 = arith.negf %74 : vector<8x128xf32>
    %76 = math.exp %75 : vector<8x128xf32>
    %cst_27 = arith.constant 1.000000e+00 : f32
    %77 = vector.broadcast %cst_27 : f32 to vector<8x128xf32>
    %78 = arith.addf %77, %76 : vector<8x128xf32>
    %79 = arith.divf %77, %78 : vector<8x128xf32>
    %80 = vector.extract_strided_slice %73 {offsets = [0, 128], sizes = [8, 128], strides = [1, 1]} : vector<8x512xf32> to vector<8x128xf32>
    %81 = arith.negf %80 : vector<8x128xf32>
    %82 = math.exp %81 : vector<8x128xf32>
    %cst_28 = arith.constant 1.000000e+00 : f32
    %83 = vector.broadcast %cst_28 : f32 to vector<8x128xf32>
    %84 = arith.addf %83, %82 : vector<8x128xf32>
    %85 = arith.divf %83, %84 : vector<8x128xf32>
    %86 = vector.extract_strided_slice %73 {offsets = [0, 256], sizes = [8, 128], strides = [1, 1]} : vector<8x512xf32> to vector<8x128xf32>
    %87 = math.tanh %86 : vector<8x128xf32>
    %88 = vector.extract_strided_slice %73 {offsets = [0, 384], sizes = [8, 128], strides = [1, 1]} : vector<8x512xf32> to vector<8x128xf32>
    %89 = arith.negf %88 : vector<8x128xf32>
    %90 = math.exp %89 : vector<8x128xf32>
    %cst_29 = arith.constant 1.000000e+00 : f32
    %91 = vector.broadcast %cst_29 : f32 to vector<8x128xf32>
    %92 = arith.addf %91, %90 : vector<8x128xf32>
    %93 = arith.divf %91, %92 : vector<8x128xf32>
    %94 = arith.mulf %85, %66 : vector<8x128xf32>
    %95 = arith.mulf %79, %87 : vector<8x128xf32>
    %96 = arith.addf %94, %95 : vector<8x128xf32>
    %97 = math.tanh %96 : vector<8x128xf32>
    %98 = arith.mulf %93, %97 : vector<8x128xf32>
    %c24 = arith.constant 24 : index
    %c0_30 = arith.constant 0 : index
    %99 = vector.load %arg4[%c24, %c0_30] : memref<64x512xf32, #tpu.memory_space<vmem>>, vector<8x512xf32>
    %100 = arith.truncf %98 : vector<8x128xf32> to vector<8x128xbf16>
    %c0_31 = arith.constant 0 : index
    %c0_32 = arith.constant 0 : index
    %101 = vector.load %arg2[%c0_31, %c0_32] : memref<128x512xbf16, #tpu.memory_space<vmem>>, vector<128x512xbf16>
    %cst_33 = arith.constant dense<0.000000e+00> : vector<8x512xf32>
    %102 = tpu.matmul %100, %101, %cst_33 {dimension_numbers = #tpu.dot_dimension_numbers<[1], [0], [0], [1], [0, 0, 1, 1], [], []>} : vector<8x128xbf16>, vector<128x512xbf16>, vector<8x512xf32> -> vector<8x512xf32>
    %103 = arith.addf %99, %102 : vector<8x512xf32>
    %104 = vector.extract_strided_slice %103 {offsets = [0, 0], sizes = [8, 128], strides = [1, 1]} : vector<8x512xf32> to vector<8x128xf32>
    %105 = arith.negf %104 : vector<8x128xf32>
    %106 = math.exp %105 : vector<8x128xf32>
    %cst_34 = arith.constant 1.000000e+00 : f32
    %107 = vector.broadcast %cst_34 : f32 to vector<8x128xf32>
    %108 = arith.addf %107, %106 : vector<8x128xf32>
    %109 = arith.divf %107, %108 : vector<8x128xf32>
    %110 = vector.extract_strided_slice %103 {offsets = [0, 128], sizes = [8, 128], strides = [1, 1]} : vector<8x512xf32> to vector<8x128xf32>
    %111 = arith.negf %110 : vector<8x128xf32>
    %112 = math.exp %111 : vector<8x128xf32>
    %cst_35 = arith.constant 1.000000e+00 : f32
    %113 = vector.broadcast %cst_35 : f32 to vector<8x128xf32>
    %114 = arith.addf %113, %112 : vector<8x128xf32>
    %115 = arith.divf %113, %114 : vector<8x128xf32>
    %116 = vector.extract_strided_slice %103 {offsets = [0, 256], sizes = [8, 128], strides = [1, 1]} : vector<8x512xf32> to vector<8x128xf32>
    %117 = math.tanh %116 : vector<8x128xf32>
    %118 = vector.extract_strided_slice %103 {offsets = [0, 384], sizes = [8, 128], strides = [1, 1]} : vector<8x512xf32> to vector<8x128xf32>
    %119 = arith.negf %118 : vector<8x128xf32>
    %120 = math.exp %119 : vector<8x128xf32>
    %cst_36 = arith.constant 1.000000e+00 : f32
    %121 = vector.broadcast %cst_36 : f32 to vector<8x128xf32>
    %122 = arith.addf %121, %120 : vector<8x128xf32>
    %123 = arith.divf %121, %122 : vector<8x128xf32>
    %124 = arith.mulf %115, %96 : vector<8x128xf32>
    %125 = arith.mulf %109, %117 : vector<8x128xf32>
    %126 = arith.addf %124, %125 : vector<8x128xf32>
    %127 = math.tanh %126 : vector<8x128xf32>
    %128 = arith.mulf %123, %127 : vector<8x128xf32>
    %c32 = arith.constant 32 : index
    %c0_37 = arith.constant 0 : index
    %129 = vector.load %arg4[%c32, %c0_37] : memref<64x512xf32, #tpu.memory_space<vmem>>, vector<8x512xf32>
    %130 = arith.truncf %128 : vector<8x128xf32> to vector<8x128xbf16>
    %c0_38 = arith.constant 0 : index
    %c0_39 = arith.constant 0 : index
    %131 = vector.load %arg2[%c0_38, %c0_39] : memref<128x512xbf16, #tpu.memory_space<vmem>>, vector<128x512xbf16>
    %cst_40 = arith.constant dense<0.000000e+00> : vector<8x512xf32>
    %132 = tpu.matmul %130, %131, %cst_40 {dimension_numbers = #tpu.dot_dimension_numbers<[1], [0], [0], [1], [0, 0, 1, 1], [], []>} : vector<8x128xbf16>, vector<128x512xbf16>, vector<8x512xf32> -> vector<8x512xf32>
    %133 = arith.addf %129, %132 : vector<8x512xf32>
    %134 = vector.extract_strided_slice %133 {offsets = [0, 0], sizes = [8, 128], strides = [1, 1]} : vector<8x512xf32> to vector<8x128xf32>
    %135 = arith.negf %134 : vector<8x128xf32>
    %136 = math.exp %135 : vector<8x128xf32>
    %cst_41 = arith.constant 1.000000e+00 : f32
    %137 = vector.broadcast %cst_41 : f32 to vector<8x128xf32>
    %138 = arith.addf %137, %136 : vector<8x128xf32>
    %139 = arith.divf %137, %138 : vector<8x128xf32>
    %140 = vector.extract_strided_slice %133 {offsets = [0, 128], sizes = [8, 128], strides = [1, 1]} : vector<8x512xf32> to vector<8x128xf32>
    %141 = arith.negf %140 : vector<8x128xf32>
    %142 = math.exp %141 : vector<8x128xf32>
    %cst_42 = arith.constant 1.000000e+00 : f32
    %143 = vector.broadcast %cst_42 : f32 to vector<8x128xf32>
    %144 = arith.addf %143, %142 : vector<8x128xf32>
    %145 = arith.divf %143, %144 : vector<8x128xf32>
    %146 = vector.extract_strided_slice %133 {offsets = [0, 256], sizes = [8, 128], strides = [1, 1]} : vector<8x512xf32> to vector<8x128xf32>
    %147 = math.tanh %146 : vector<8x128xf32>
    %148 = vector.extract_strided_slice %133 {offsets = [0, 384], sizes = [8, 128], strides = [1, 1]} : vector<8x512xf32> to vector<8x128xf32>
    %149 = arith.negf %148 : vector<8x128xf32>
    %150 = math.exp %149 : vector<8x128xf32>
    %cst_43 = arith.constant 1.000000e+00 : f32
    %151 = vector.broadcast %cst_43 : f32 to vector<8x128xf32>
    %152 = arith.addf %151, %150 : vector<8x128xf32>
    %153 = arith.divf %151, %152 : vector<8x128xf32>
    %154 = arith.mulf %145, %126 : vector<8x128xf32>
    %155 = arith.mulf %139, %147 : vector<8x128xf32>
    %156 = arith.addf %154, %155 : vector<8x128xf32>
    %157 = math.tanh %156 : vector<8x128xf32>
    %158 = arith.mulf %153, %157 : vector<8x128xf32>
    %c40 = arith.constant 40 : index
    %c0_44 = arith.constant 0 : index
    %159 = vector.load %arg4[%c40, %c0_44] : memref<64x512xf32, #tpu.memory_space<vmem>>, vector<8x512xf32>
    %160 = arith.truncf %158 : vector<8x128xf32> to vector<8x128xbf16>
    %c0_45 = arith.constant 0 : index
    %c0_46 = arith.constant 0 : index
    %161 = vector.load %arg2[%c0_45, %c0_46] : memref<128x512xbf16, #tpu.memory_space<vmem>>, vector<128x512xbf16>
    %cst_47 = arith.constant dense<0.000000e+00> : vector<8x512xf32>
    %162 = tpu.matmul %160, %161, %cst_47 {dimension_numbers = #tpu.dot_dimension_numbers<[1], [0], [0], [1], [0, 0, 1, 1], [], []>} : vector<8x128xbf16>, vector<128x512xbf16>, vector<8x512xf32> -> vector<8x512xf32>
    %163 = arith.addf %159, %162 : vector<8x512xf32>
    %164 = vector.extract_strided_slice %163 {offsets = [0, 0], sizes = [8, 128], strides = [1, 1]} : vector<8x512xf32> to vector<8x128xf32>
    %165 = arith.negf %164 : vector<8x128xf32>
    %166 = math.exp %165 : vector<8x128xf32>
    %cst_48 = arith.constant 1.000000e+00 : f32
    %167 = vector.broadcast %cst_48 : f32 to vector<8x128xf32>
    %168 = arith.addf %167, %166 : vector<8x128xf32>
    %169 = arith.divf %167, %168 : vector<8x128xf32>
    %170 = vector.extract_strided_slice %163 {offsets = [0, 128], sizes = [8, 128], strides = [1, 1]} : vector<8x512xf32> to vector<8x128xf32>
    %171 = arith.negf %170 : vector<8x128xf32>
    %172 = math.exp %171 : vector<8x128xf32>
    %cst_49 = arith.constant 1.000000e+00 : f32
    %173 = vector.broadcast %cst_49 : f32 to vector<8x128xf32>
    %174 = arith.addf %173, %172 : vector<8x128xf32>
    %175 = arith.divf %173, %174 : vector<8x128xf32>
    %176 = vector.extract_strided_slice %163 {offsets = [0, 256], sizes = [8, 128], strides = [1, 1]} : vector<8x512xf32> to vector<8x128xf32>
    %177 = math.tanh %176 : vector<8x128xf32>
    %178 = vector.extract_strided_slice %163 {offsets = [0, 384], sizes = [8, 128], strides = [1, 1]} : vector<8x512xf32> to vector<8x128xf32>
    %179 = arith.negf %178 : vector<8x128xf32>
    %180 = math.exp %179 : vector<8x128xf32>
    %cst_50 = arith.constant 1.000000e+00 : f32
    %181 = vector.broadcast %cst_50 : f32 to vector<8x128xf32>
    %182 = arith.addf %181, %180 : vector<8x128xf32>
    %183 = arith.divf %181, %182 : vector<8x128xf32>
    %184 = arith.mulf %175, %156 : vector<8x128xf32>
    %185 = arith.mulf %169, %177 : vector<8x128xf32>
    %186 = arith.addf %184, %185 : vector<8x128xf32>
    %187 = math.tanh %186 : vector<8x128xf32>
    %188 = arith.mulf %183, %187 : vector<8x128xf32>
    %c48 = arith.constant 48 : index
    %c0_51 = arith.constant 0 : index
    %189 = vector.load %arg4[%c48, %c0_51] : memref<64x512xf32, #tpu.memory_space<vmem>>, vector<8x512xf32>
    %190 = arith.truncf %188 : vector<8x128xf32> to vector<8x128xbf16>
    %c0_52 = arith.constant 0 : index
    %c0_53 = arith.constant 0 : index
    %191 = vector.load %arg2[%c0_52, %c0_53] : memref<128x512xbf16, #tpu.memory_space<vmem>>, vector<128x512xbf16>
    %cst_54 = arith.constant dense<0.000000e+00> : vector<8x512xf32>
    %192 = tpu.matmul %190, %191, %cst_54 {dimension_numbers = #tpu.dot_dimension_numbers<[1], [0], [0], [1], [0, 0, 1, 1], [], []>} : vector<8x128xbf16>, vector<128x512xbf16>, vector<8x512xf32> -> vector<8x512xf32>
    %193 = arith.addf %189, %192 : vector<8x512xf32>
    %194 = vector.extract_strided_slice %193 {offsets = [0, 0], sizes = [8, 128], strides = [1, 1]} : vector<8x512xf32> to vector<8x128xf32>
    %195 = arith.negf %194 : vector<8x128xf32>
    %196 = math.exp %195 : vector<8x128xf32>
    %cst_55 = arith.constant 1.000000e+00 : f32
    %197 = vector.broadcast %cst_55 : f32 to vector<8x128xf32>
    %198 = arith.addf %197, %196 : vector<8x128xf32>
    %199 = arith.divf %197, %198 : vector<8x128xf32>
    %200 = vector.extract_strided_slice %193 {offsets = [0, 128], sizes = [8, 128], strides = [1, 1]} : vector<8x512xf32> to vector<8x128xf32>
    %201 = arith.negf %200 : vector<8x128xf32>
    %202 = math.exp %201 : vector<8x128xf32>
    %cst_56 = arith.constant 1.000000e+00 : f32
    %203 = vector.broadcast %cst_56 : f32 to vector<8x128xf32>
    %204 = arith.addf %203, %202 : vector<8x128xf32>
    %205 = arith.divf %203, %204 : vector<8x128xf32>
    %206 = vector.extract_strided_slice %193 {offsets = [0, 256], sizes = [8, 128], strides = [1, 1]} : vector<8x512xf32> to vector<8x128xf32>
    %207 = math.tanh %206 : vector<8x128xf32>
    %208 = vector.extract_strided_slice %193 {offsets = [0, 384], sizes = [8, 128], strides = [1, 1]} : vector<8x512xf32> to vector<8x128xf32>
    %209 = arith.negf %208 : vector<8x128xf32>
    %210 = math.exp %209 : vector<8x128xf32>
    %cst_57 = arith.constant 1.000000e+00 : f32
    %211 = vector.broadcast %cst_57 : f32 to vector<8x128xf32>
    %212 = arith.addf %211, %210 : vector<8x128xf32>
    %213 = arith.divf %211, %212 : vector<8x128xf32>
    %214 = arith.mulf %205, %186 : vector<8x128xf32>
    %215 = arith.mulf %199, %207 : vector<8x128xf32>
    %216 = arith.addf %214, %215 : vector<8x128xf32>
    %217 = math.tanh %216 : vector<8x128xf32>
    %218 = arith.mulf %213, %217 : vector<8x128xf32>
    %c56 = arith.constant 56 : index
    %c0_58 = arith.constant 0 : index
    %219 = vector.load %arg4[%c56, %c0_58] : memref<64x512xf32, #tpu.memory_space<vmem>>, vector<8x512xf32>
    %220 = arith.truncf %218 : vector<8x128xf32> to vector<8x128xbf16>
    %c0_59 = arith.constant 0 : index
    %c0_60 = arith.constant 0 : index
    %221 = vector.load %arg2[%c0_59, %c0_60] : memref<128x512xbf16, #tpu.memory_space<vmem>>, vector<128x512xbf16>
    %cst_61 = arith.constant dense<0.000000e+00> : vector<8x512xf32>
    %222 = tpu.matmul %220, %221, %cst_61 {dimension_numbers = #tpu.dot_dimension_numbers<[1], [0], [0], [1], [0, 0, 1, 1], [], []>} : vector<8x128xbf16>, vector<128x512xbf16>, vector<8x512xf32> -> vector<8x512xf32>
    %223 = arith.addf %219, %222 : vector<8x512xf32>
    %224 = vector.extract_strided_slice %223 {offsets = [0, 0], sizes = [8, 128], strides = [1, 1]} : vector<8x512xf32> to vector<8x128xf32>
    %225 = arith.negf %224 : vector<8x128xf32>
    %226 = math.exp %225 : vector<8x128xf32>
    %cst_62 = arith.constant 1.000000e+00 : f32
    %227 = vector.broadcast %cst_62 : f32 to vector<8x128xf32>
    %228 = arith.addf %227, %226 : vector<8x128xf32>
    %229 = arith.divf %227, %228 : vector<8x128xf32>
    %230 = vector.extract_strided_slice %223 {offsets = [0, 128], sizes = [8, 128], strides = [1, 1]} : vector<8x512xf32> to vector<8x128xf32>
    %231 = arith.negf %230 : vector<8x128xf32>
    %232 = math.exp %231 : vector<8x128xf32>
    %cst_63 = arith.constant 1.000000e+00 : f32
    %233 = vector.broadcast %cst_63 : f32 to vector<8x128xf32>
    %234 = arith.addf %233, %232 : vector<8x128xf32>
    %235 = arith.divf %233, %234 : vector<8x128xf32>
    %236 = vector.extract_strided_slice %223 {offsets = [0, 256], sizes = [8, 128], strides = [1, 1]} : vector<8x512xf32> to vector<8x128xf32>
    %237 = math.tanh %236 : vector<8x128xf32>
    %238 = vector.extract_strided_slice %223 {offsets = [0, 384], sizes = [8, 128], strides = [1, 1]} : vector<8x512xf32> to vector<8x128xf32>
    %239 = arith.negf %238 : vector<8x128xf32>
    %240 = math.exp %239 : vector<8x128xf32>
    %cst_64 = arith.constant 1.000000e+00 : f32
    %241 = vector.broadcast %cst_64 : f32 to vector<8x128xf32>
    %242 = arith.addf %241, %240 : vector<8x128xf32>
    %243 = arith.divf %241, %242 : vector<8x128xf32>
    %244 = arith.mulf %235, %216 : vector<8x128xf32>
    %245 = arith.mulf %229, %237 : vector<8x128xf32>
    %246 = arith.addf %244, %245 : vector<8x128xf32>
    %247 = math.tanh %246 : vector<8x128xf32>
    %248 = arith.mulf %243, %247 : vector<8x128xf32>
    %249 = tpu.concatenate %38, %68, %98, %128, %158, %188, %218, %248 in 0 : vector<8x128xf32>, vector<8x128xf32>, vector<8x128xf32>, vector<8x128xf32>, vector<8x128xf32>, vector<8x128xf32>, vector<8x128xf32>, vector<8x128xf32> -> vector<64x128xf32>
    %c64 = arith.constant 64 : index
    %c0_65 = arith.constant 0 : index
    %250 = vector.load %arg0[%c64, %c0_65] : memref<336x128xf32, #tpu.memory_space<vmem>>, vector<128x128xf32>
    %c192 = arith.constant 192 : index
    %c0_66 = arith.constant 0 : index
    %251 = vector.load %arg0[%c192, %c0_66] : memref<336x128xf32, #tpu.memory_space<vmem>>, vector<128x128xf32>
    %c320 = arith.constant 320 : index
    %c0_67 = arith.constant 0 : index
    %252 = vector.load %arg0[%c320, %c0_67] : memref<336x128xf32, #tpu.memory_space<vmem>>, vector<1x128xf32>
    %c328 = arith.constant 328 : index
    %c0_68 = arith.constant 0 : index
    %253 = vector.load %arg0[%c328, %c0_68] : memref<336x128xf32, #tpu.memory_space<vmem>>, vector<1x128xf32>
    %cst_69 = arith.constant dense<0.000000e+00> : vector<64x128xf32>
    %254 = tpu.matmul %249, %250, %cst_69 {dimension_numbers = #tpu.dot_dimension_numbers<[1], [0], [0], [1], [0, 0, 1, 1], [], []>} : vector<64x128xf32>, vector<128x128xf32>, vector<64x128xf32> -> vector<64x128xf32>
    %255 = vector.broadcast %252 : vector<1x128xf32> to vector<64x128xf32>
    %256 = arith.addf %254, %255 : vector<64x128xf32>
    %cst_70 = arith.constant 0.000000e+00 : f32
    %257 = vector.broadcast %cst_70 : f32 to vector<64x128xf32>
    %258 = arith.maximumf %256, %257 : vector<64x128xf32>
    %cst_71 = arith.constant dense<0.000000e+00> : vector<64x128xf32>
    %259 = tpu.matmul %258, %251, %cst_71 {dimension_numbers = #tpu.dot_dimension_numbers<[1], [0], [0], [1], [0, 0, 1, 1], [], []>} : vector<64x128xf32>, vector<128x128xf32>, vector<64x128xf32> -> vector<64x128xf32>
    %260 = vector.broadcast %253 : vector<1x128xf32> to vector<64x128xf32>
    %261 = arith.addf %259, %260 : vector<64x128xf32>
    %262 = math.tanh %261 : vector<64x128xf32>
    %c0_72 = arith.constant 0 : index
    %c0_73 = arith.constant 0 : index
    %263 = vector.load %arg3[%c0_72, %c0_73] : memref<64x128xf32, #tpu.memory_space<vmem>>, vector<64x128xf32>
    tpu.vector_store %arg3[%c0_72, %c0_73], %262 {strides = array<i32>} : memref<64x128xf32, #tpu.memory_space<vmem>>, vector<64x128xf32>,
    return
  }
}

</mosaic_0001>

<llo_original>
// kernel: tpu_custom_call.1
$region0: #{tpu_custom_call.1}
  #allocation0 [shape = 'u32[]', space=smem, size = 0x4, offset = 0x4, fixed_abs, tag = 'smem constant byte address 0x4 - core index']
  #allocation1 [shape = 'u32[72,128]{1,0:T(1,128)}', space=vmem, size = 0x9000, scoped, tag = 'internal scratch']
  #allocation2 [shape = 'f32[64,512]{1,0:T(8,128)}', space=vmem, size = 0x20000, scoped, tag = 'scratch operand']
  %s0 = inlined_call_operand.hbm [shape: f32[336,128], index: 0, kind: input, shape index: {}]
  %s1 = inlined_call_operand.hbm [shape: f32[136,512], index: 1, kind: input, shape index: {}]
  %s2 = inlined_call_operand.hbm [shape: bf16[128,512], index: 2, kind: input, shape index: {}]
  %s3 = inlined_call_operand.hbm [shape: f32[64,128], index: 3, kind: output, shape index: {}]
  %s4 = sld [smem:[#allocation0]]
  $region34: #{tpu_custom_call.1} parent=0
    _
  %s6 = ssub.s32 1, %s4
  %s7 = scalar_select 0, %s6, %s4
  $region1: #{tpu_custom_call.1} parent=0
    #allocation3 [shape = 'u8[172032]{0}', space=vmem, size = 0x2a000, scoped, tag = 'input window, operand 0, single buffered']
    #allocation4 [shape = 's32[1]{0}', space=sflag, size = 0x4, scoped, tag = 'scoped memory for tpu_custom_call.1']
    #allocation5 [shape = 's32[1]{0}', space=sflag, size = 0x4, scoped, tag = 'scoped memory for tpu_custom_call.1']
    #allocation6 [shape = 'u8[278528]{0}', space=vmem, size = 0x44000, scoped, tag = 'input window, operand 1, single buffered']
    #allocation7 [shape = 's32[1]{0}', space=sflag, size = 0x4, scoped, tag = 'scoped memory for tpu_custom_call.1']
    #allocation8 [shape = 'u8[131072]{0}', space=vmem, size = 0x20000, scoped, tag = 'input window, operand 2, single buffered']
    #allocation9 [shape = 'u8[32768]{0}', space=vmem, size = 0x8000, scoped, tag = 'output window, operand 0, single buffered']
    %8 = vsyncpa [#allocation4], 0
    %9 = vsyncpa [#allocation7], 0
    %10 = vsyncpa [#allocation5], 0
    // Predicated region
    $region2: #{tpu_custom_call.1} parent=1 // pred_check
      _
    $region3: #{tpu_custom_call.1} parent=1 // pred_check_branch
      %12 = sbr.rel (0) target = $region5
    $region4: #{tpu_custom_call.1} parent=1 // pred_region
      %14 = vsyncadd [#allocation4], 0
      %s15 = sshll.u32 %s0, 4
      %s16 = int_to_ptr.hbm [resolvable:$true] %s15
      %s17 = sshll.u32 [#allocation3], 4
      %s18 = int_to_ptr.vmem [resolvable:$true] %s17
      %23 = dma.hbm_to_vmem [thread:$0]  %s16, 5376, %s18, [#allocation4], 128, 128, 8
    $region5: #{tpu_custom_call.1} parent=1 // pred_fallthru
      _
    // Predicated region
    $region6: #{tpu_custom_call.1} parent=1 // pred_check
      _
    $region7: #{tpu_custom_call.1} parent=1 // pred_check_branch
      %25 = sbr.rel (0) target = $region9
    $region8: #{tpu_custom_call.1} parent=1 // pred_region
      %27 = vsyncadd [#allocation7], 0
      %s28 = sshll.u32 %s1, 4
      %s29 = int_to_ptr.hbm [resolvable:$true] %s28
      %s30 = sshll.u32 [#allocation6], 4
      %s31 = int_to_ptr.vmem [resolvable:$true] %s30
      %36 = dma.hbm_to_vmem [thread:$0]  %s29, 8704, %s31, [#allocation7], 512, 512, 32
    $region9: #{tpu_custom_call.1} parent=1 // pred_fallthru
      _
    // Predicated region
    $region10: #{tpu_custom_call.1} parent=1 // pred_check
      _
    $region11: #{tpu_custom_call.1} parent=1 // pred_check_branch
      %38 = sbr.rel (0) target = $region13
    $region12: #{tpu_custom_call.1} parent=1 // pred_region
      %40 = vsyncadd [#allocation7], 0
      %s41 = sshll.u32 %s2, 4
      %s42 = int_to_ptr.hbm [resolvable:$true] %s41
      %s43 = sshll.u32 [#allocation8], 4
      %s44 = int_to_ptr.vmem [resolvable:$true] %s43
      %49 = dma.hbm_to_vmem [thread:$0]  %s42, 4096, %s44, [#allocation7], 256, 256, 16
    $region13: #{tpu_custom_call.1} parent=1 // pred_fallthru
      _
    // Predicated region
    $region14: #{tpu_custom_call.1} parent=1 // pred_check
      _
    $region15: #{tpu_custom_call.1} parent=1 // pred_check_branch
      %51 = sbr.rel (0) target = $region17
    $region16: #{tpu_custom_call.1} parent=1 // pred_region
      %53 = dma.done [#allocation4], 5376
    $region17: #{tpu_custom_call.1} parent=1 // pred_fallthru
      _
    // Predicated region
    $region18: #{tpu_custom_call.1} parent=1 // pred_check
      _
    $region19: #{tpu_custom_call.1} parent=1 // pred_check_branch
      %55 = sbr.rel (0) target = $region21
    $region20: #{tpu_custom_call.1} parent=1 // pred_region
      %57 = dma.done [#allocation7], 8704
    $region21: #{tpu_custom_call.1} parent=1 // pred_fallthru
      _
    // Predicated region
    $region22: #{tpu_custom_call.1} parent=1 // pred_check
      _
    $region23: #{tpu_custom_call.1} parent=1 // pred_check_branch
      %59 = sbr.rel (0) target = $region25
    $region24: #{tpu_custom_call.1} parent=1 // pred_region
      %61 = dma.done [#allocation7], 4096
    $region25: #{tpu_custom_call.1} parent=1 // pred_fallthru
      _
    %v63 = vld [vmem:[#allocation3] sm:$0xff]
    %v64 = vld [vmem:[#allocation3 + $0x8] sm:$0xff]
    %v65 = vld [vmem:[#allocation3 + $0x10] sm:$0xff]
    %v66 = vld [vmem:[#allocation3 + $0x18] sm:$0xff]
    %v67 = vld [vmem:[#allocation3 + $0x20] sm:$0xff]
    %v68 = vld [vmem:[#allocation3 + $0x28] sm:$0xff]
    %v69 = vld [vmem:[#allocation3 + $0x30] sm:$0xff]
    %v70 = vld [vmem:[#allocation3 + $0x38] sm:$0xff]
    %v71 = vld [vmem:[#allocation6] sm:$0xff]
    %v72 = vld [vmem:[#allocation6 + $0x8] sm:$0xff]
    %v73 = vld [vmem:[#allocation6 + $0x10] sm:$0xff]
    %v74 = vld [vmem:[#allocation6 + $0x18] sm:$0xff]
    %v75 = vld [vmem:[#allocation6 + $0x20] sm:$0xff]
    %v76 = vld [vmem:[#allocation6 + $0x28] sm:$0xff]
    %v77 = vld [vmem:[#allocation6 + $0x30] sm:$0xff]
    %v78 = vld [vmem:[#allocation6 + $0x38] sm:$0xff]
    %v79 = vld [vmem:[#allocation6 + $0x40] sm:$0xff]
    %v80 = vld [vmem:[#allocation6 + $0x48] sm:$0xff]
    %v81 = vld [vmem:[#allocation6 + $0x50] sm:$0xff]
    %v82 = vld [vmem:[#allocation6 + $0x58] sm:$0xff]
    %v83 = vld [vmem:[#allocation6 + $0x60] sm:$0xff]
    %v84 = vld [vmem:[#allocation6 + $0x68] sm:$0xff]
    %v85 = vld [vmem:[#allocation6 + $0x70] sm:$0xff]
    %v86 = vld [vmem:[#allocation6 + $0x78] sm:$0xff]
    %v87 = vld [vmem:[#allocation6 + $0x80] sm:$0xff]
    %v88 = vld [vmem:[#allocation6 + $0x88] sm:$0xff]
    %v89 = vld [vmem:[#allocation6 + $0x90] sm:$0xff]
    %v90 = vld [vmem:[#allocation6 + $0x98] sm:$0xff]
    %v91 = vld [vmem:[#allocation6 + $0xa0] sm:$0xff]
    %v92 = vld [vmem:[#allocation6 + $0xa8] sm:$0xff]
    %v93 = vld [vmem:[#allocation6 + $0xb0] sm:$0xff]
    %v94 = vld [vmem:[#allocation6 + $0xb8] sm:$0xff]
    %v95 = vld [vmem:[#allocation6 + $0xc0] sm:$0xff]
    %v96 = vld [vmem:[#allocation6 + $0xc8] sm:$0xff]
    %v97 = vld [vmem:[#allocation6 + $0xd0] sm:$0xff]
    %v98 = vld [vmem:[#allocation6 + $0xd8] sm:$0xff]
    %v99 = vld [vmem:[#allocation6 + $0xe0] sm:$0xff]
    %v100 = vld [vmem:[#allocation6 + $0xe8] sm:$0xff]
    %v101 = vld [vmem:[#allocation6 + $0xf0] sm:$0xff]
    %v102 = vld [vmem:[#allocation6 + $0xf8] sm:$0xff]
    %v103 = vld [vmem:[#allocation6 + $0x100] sm:$0xff]
    %v104 = vld [vmem:[#allocation6 + $0x108] sm:$0xff]
    %v105 = vld [vmem:[#allocation6 + $0x110] sm:$0xff]
    %v106 = vld [vmem:[#allocation6 + $0x118] sm:$0xff]
    %v107 = vld [vmem:[#allocation6 + $0x120] sm:$0xff]
    %v108 = vld [vmem:[#allocation6 + $0x128] sm:$0xff]
    %v109 = vld [vmem:[#allocation6 + $0x130] sm:$0xff]
    %v110 = vld [vmem:[#allocation6 + $0x138] sm:$0xff]
    %v111 = vld [vmem:[#allocation6 + $0x140] sm:$0xff]
    %v112 = vld [vmem:[#allocation6 + $0x148] sm:$0xff]
    %v113 = vld [vmem:[#allocation6 + $0x150] sm:$0xff]
    %v114 = vld [vmem:[#allocation6 + $0x158] sm:$0xff]
    %v115 = vld [vmem:[#allocation6 + $0x160] sm:$0xff]
    %v116 = vld [vmem:[#allocation6 + $0x168] sm:$0xff]
    %v117 = vld [vmem:[#allocation6 + $0x170] sm:$0xff]
    %v118 = vld [vmem:[#allocation6 + $0x178] sm:$0xff]
    %v119 = vld [vmem:[#allocation6 + $0x180] sm:$0xff]
    %v120 = vld [vmem:[#allocation6 + $0x188] sm:$0xff]
    %v121 = vld [vmem:[#allocation6 + $0x190] sm:$0xff]
    %v122 = vld [vmem:[#allocation6 + $0x198] sm:$0xff]
    %v123 = vld [vmem:[#allocation6 + $0x1a0] sm:$0xff]
    %v124 = vld [vmem:[#allocation6 + $0x1a8] sm:$0xff]
    %v125 = vld [vmem:[#allocation6 + $0x1b0] sm:$0xff]
    %v126 = vld [vmem:[#allocation6 + $0x1b8] sm:$0xff]
    %v127 = vld [vmem:[#allocation6 + $0x1c0] sm:$0xff]
    %v128 = vld [vmem:[#allocation6 + $0x1c8] sm:$0xff]
    %v129 = vld [vmem:[#allocation6 + $0x1d0] sm:$0xff]
    %v130 = vld [vmem:[#allocation6 + $0x1d8] sm:$0xff]
    %v131 = vld [vmem:[#allocation6 + $0x1e0] sm:$0xff]
    %v132 = vld [vmem:[#allocation6 + $0x1e8] sm:$0xff]
    %v133 = vld [vmem:[#allocation6 + $0x1f0] sm:$0xff]
    %v134 = vld [vmem:[#allocation6 + $0x1f8] sm:$0xff]
    %s135 = scalar_lea.vmem [#allocation6], 512
    %v136 = vld [vmem:[%s135] ss:$8 sm:$0xf]
    %v138 = vperm.slane %v136, 0
    %v139 = vperm.slane %v136, 1
    %v140 = vperm.slane %v136, 2
    %v141 = vperm.slane %v136, 3
    %146 = vmatpush.msra.mxu0 %v131
    %147 = vmatpush.msra.mxu0 %v127
    %148 = vmatpush.msra.mxu0 %v123
    %149 = vmatpush.msra.mxu0 %v119
    %150 = vmatpush.msra.mxu0 %v115
    %151 = vmatpush.msra.mxu0 %v111
    %152 = vmatpush.msra.mxu0 %v107
    %153 = vmatpush.msra.mxu0 %v103
    %154 = vmatpush.msra.mxu0 %v99
    %155 = vmatpush.msra.mxu0 %v95
    %156 = vmatpush.msra.mxu0 %v91
    %157 = vmatpush.msra.mxu0 %v87
    %158 = vmatpush.msra.mxu0 %v83
    %159 = vmatpush.msra.mxu0 %v79
    %160 = vmatpush.msra.mxu0 %v75
    %161 = vmatpush.msra.mxu0 %v71
    %162 = vmatmul.f32.gmra.mxu0 %v63
    %v163 = vpop.f32.mrf.mxu0
    %v164 = vadd.f32 %v138, %v163
    %165 = vmatmul.f32.gmra.mxu0 %v64
    %v166 = vpop.f32.mrf.mxu0
    %v167 = vadd.f32 %v138, %v166
    %168 = vmatmul.f32.gmra.mxu0 %v65
    %v169 = vpop.f32.mrf.mxu0
    %v170 = vadd.f32 %v138, %v169
    %171 = vmatmul.f32.gmra.mxu0 %v66
    %v172 = vpop.f32.mrf.mxu0
    %v173 = vadd.f32 %v138, %v172
    %174 = vmatmul.f32.gmra.mxu0 %v67
    %v175 = vpop.f32.mrf.mxu0
    %v176 = vadd.f32 %v138, %v175
    %177 = vmatmul.f32.gmra.mxu0 %v68
    %v178 = vpop.f32.mrf.mxu0
    %v179 = vadd.f32 %v138, %v178
    %180 = vmatmul.f32.gmra.mxu0 %v69
    %v181 = vpop.f32.mrf.mxu0
    %v182 = vadd.f32 %v138, %v181
    %183 = vmatmul.f32.gmra.mxu0 %v70
    %v184 = vpop.f32.mrf.mxu0
    %v185 = vadd.f32 %v138, %v184
    %186 = vdwg.mxu0
    %187 = vmatpush.msra.mxu0 %v132
    %188 = vmatpush.msra.mxu0 %v128
    %189 = vmatpush.msra.mxu0 %v124
    %190 = vmatpush.msra.mxu0 %v120
    %191 = vmatpush.msra.mxu0 %v116
    %192 = vmatpush.msra.mxu0 %v112
    %193 = vmatpush.msra.mxu0 %v108
    %194 = vmatpush.msra.mxu0 %v104
    %195 = vmatpush.msra.mxu0 %v100
    %196 = vmatpush.msra.mxu0 %v96
    %197 = vmatpush.msra.mxu0 %v92
    %198 = vmatpush.msra.mxu0 %v88
    %199 = vmatpush.msra.mxu0 %v84
    %200 = vmatpush.msra.mxu0 %v80
    %201 = vmatpush.msra.mxu0 %v76
    %202 = vmatpush.msra.mxu0 %v72
    %203 = vmatmul.f32.gmra.mxu0 %v63
    %v204 = vpop.f32.mrf.mxu0
    %v205 = vadd.f32 %v139, %v204
    %206 = vmatmul.f32.gmra.mxu0 %v64
    %v207 = vpop.f32.mrf.mxu0
    %v208 = vadd.f32 %v139, %v207
    %209 = vmatmul.f32.gmra.mxu0 %v65
    %v210 = vpop.f32.mrf.mxu0
    %v211 = vadd.f32 %v139, %v210
    %212 = vmatmul.f32.gmra.mxu0 %v66
    %v213 = vpop.f32.mrf.mxu0
    %v214 = vadd.f32 %v139, %v213
    %215 = vmatmul.f32.gmra.mxu0 %v67
    %v216 = vpop.f32.mrf.mxu0
    %v217 = vadd.f32 %v139, %v216
    %218 = vmatmul.f32.gmra.mxu0 %v68
    %v219 = vpop.f32.mrf.mxu0
    %v220 = vadd.f32 %v139, %v219
    %221 = vmatmul.f32.gmra.mxu0 %v69
    %v222 = vpop.f32.mrf.mxu0
    %v223 = vadd.f32 %v139, %v222
    %224 = vmatmul.f32.gmra.mxu0 %v70
    %v225 = vpop.f32.mrf.mxu0
    %v226 = vadd.f32 %v139, %v225
    %227 = vdwg.mxu0
    %228 = vmatpush.msra.mxu0 %v133
    %229 = vmatpush.msra.mxu0 %v129
    %230 = vmatpush.msra.mxu0 %v125
    %231 = vmatpush.msra.mxu0 %v121
    %232 = vmatpush.msra.mxu0 %v117
    %233 = vmatpush.msra.mxu0 %v113
    %234 = vmatpush.msra.mxu0 %v109
    %235 = vmatpush.msra.mxu0 %v105
    %236 = vmatpush.msra.mxu0 %v101
    %237 = vmatpush.msra.mxu0 %v97
    %238 = vmatpush.msra.mxu0 %v93
    %239 = vmatpush.msra.mxu0 %v89
    %240 = vmatpush.msra.mxu0 %v85
    %241 = vmatpush.msra.mxu0 %v81
    %242 = vmatpush.msra.mxu0 %v77
    %243 = vmatpush.msra.mxu0 %v73
    %244 = vmatmul.f32.gmra.mxu0 %v63
    %v245 = vpop.f32.mrf.mxu0
    %v246 = vadd.f32 %v140, %v245
    %247 = vmatmul.f32.gmra.mxu0 %v64
    %v248 = vpop.f32.mrf.mxu0
    %v249 = vadd.f32 %v140, %v248
    %250 = vmatmul.f32.gmra.mxu0 %v65
    %v251 = vpop.f32.mrf.mxu0
    %v252 = vadd.f32 %v140, %v251
    %253 = vmatmul.f32.gmra.mxu0 %v66
    %v254 = vpop.f32.mrf.mxu0
    %v255 = vadd.f32 %v140, %v254
    %256 = vmatmul.f32.gmra.mxu0 %v67
    %v257 = vpop.f32.mrf.mxu0
    %v258 = vadd.f32 %v140, %v257
    %259 = vmatmul.f32.gmra.mxu0 %v68
    %v260 = vpop.f32.mrf.mxu0
    %v261 = vadd.f32 %v140, %v260
    %262 = vmatmul.f32.gmra.mxu0 %v69
    %v263 = vpop.f32.mrf.mxu0
    %v264 = vadd.f32 %v140, %v263
    %265 = vmatmul.f32.gmra.mxu0 %v70
    %v266 = vpop.f32.mrf.mxu0
    %v267 = vadd.f32 %v140, %v266
    %268 = vdwg.mxu0
    %269 = vmatpush.msra.mxu0 %v134
    %270 = vmatpush.msra.mxu0 %v130
    %271 = vmatpush.msra.mxu0 %v126
    %272 = vmatpush.msra.mxu0 %v122
    %273 = vmatpush.msra.mxu0 %v118
    %274 = vmatpush.msra.mxu0 %v114
    %275 = vmatpush.msra.mxu0 %v110
    %276 = vmatpush.msra.mxu0 %v106
    %277 = vmatpush.msra.mxu0 %v102
    %278 = vmatpush.msra.mxu0 %v98
    %279 = vmatpush.msra.mxu0 %v94
    %280 = vmatpush.msra.mxu0 %v90
    %281 = vmatpush.msra.mxu0 %v86
    %282 = vmatpush.msra.mxu0 %v82
    %283 = vmatpush.msra.mxu0 %v78
    %284 = vmatpush.msra.mxu0 %v74
    %285 = vmatmul.f32.gmra.mxu0 %v63
    %v286 = vpop.f32.mrf.mxu0
    %v287 = vadd.f32 %v141, %v286
    %288 = vmatmul.f32.gmra.mxu0 %v64
    %v289 = vpop.f32.mrf.mxu0
    %v290 = vadd.f32 %v141, %v289
    %291 = vmatmul.f32.gmra.mxu0 %v65
    %v292 = vpop.f32.mrf.mxu0
    %v293 = vadd.f32 %v141, %v292
    %294 = vmatmul.f32.gmra.mxu0 %v66
    %v295 = vpop.f32.mrf.mxu0
    %v296 = vadd.f32 %v141, %v295
    %297 = vmatmul.f32.gmra.mxu0 %v67
    %v298 = vpop.f32.mrf.mxu0
    %v299 = vadd.f32 %v141, %v298
    %300 = vmatmul.f32.gmra.mxu0 %v68
    %v301 = vpop.f32.mrf.mxu0
    %v302 = vadd.f32 %v141, %v301
    %303 = vmatmul.f32.gmra.mxu0 %v69
    %v304 = vpop.f32.mrf.mxu0
    %v305 = vadd.f32 %v141, %v304
    %306 = vmatmul.f32.gmra.mxu0 %v70
    %v307 = vpop.f32.mrf.mxu0
    %v308 = vadd.f32 %v141, %v307
    %309 = vdwg.mxu0
    %310 = vst [vmem:[#allocation2] sm:$0xff] %v164
    %311 = vst [vmem:[#allocation2 + $0x8] sm:$0xff] %v205
    %312 = vst [vmem:[#allocation2 + $0x10] sm:$0xff] %v246
    %313 = vst [vmem:[#allocation2 + $0x18] sm:$0xff] %v287
    %314 = vst [vmem:[#allocation2 + $0x20] sm:$0xff] %v167
    %315 = vst [vmem:[#allocation2 + $0x28] sm:$0xff] %v208
    %316 = vst [vmem:[#allocation2 + $0x30] sm:$0xff] %v249
    %317 = vst [vmem:[#allocation2 + $0x38] sm:$0xff] %v290
    %318 = vst [vmem:[#allocation2 + $0x40] sm:$0xff] %v170
    %319 = vst [vmem:[#allocation2 + $0x48] sm:$0xff] %v211
    %320 = vst [vmem:[#allocation2 + $0x50] sm:$0xff] %v252
    %321 = vst [vmem:[#allocation2 + $0x58] sm:$0xff] %v293
    %322 = vst [vmem:[#allocation2 + $0x60] sm:$0xff] %v173
    %323 = vst [vmem:[#allocation2 + $0x68] sm:$0xff] %v214
    %324 = vst [vmem:[#allocation2 + $0x70] sm:$0xff] %v255
    %325 = vst [vmem:[#allocation2 + $0x78] sm:$0xff] %v296
    %326 = vst [vmem:[#allocation2 + $0x80] sm:$0xff] %v176
    %327 = vst [vmem:[#allocation2 + $0x88] sm:$0xff] %v217
    %328 = vst [vmem:[#allocation2 + $0x90] sm:$0xff] %v258
    %329 = vst [vmem:[#allocation2 + $0x98] sm:$0xff] %v299
    %330 = vst [vmem:[#allocation2 + $0xa0] sm:$0xff] %v179
    %331 = vst [vmem:[#allocation2 + $0xa8] sm:$0xff] %v220
    %332 = vst [vmem:[#allocation2 + $0xb0] sm:$0xff] %v261
    %333 = vst [vmem:[#allocation2 + $0xb8] sm:$0xff] %v302
    %334 = vst [vmem:[#allocation2 + $0xc0] sm:$0xff] %v182
    %335 = vst [vmem:[#allocation2 + $0xc8] sm:$0xff] %v223
    %336 = vst [vmem:[#allocation2 + $0xd0] sm:$0xff] %v264
    %337 = vst [vmem:[#allocation2 + $0xd8] sm:$0xff] %v305
    %338 = vst [vmem:[#allocation2 + $0xe0] sm:$0xff] %v185
    %339 = vst [vmem:[#allocation2 + $0xe8] sm:$0xff] %v226
    %340 = vst [vmem:[#allocation2 + $0xf0] sm:$0xff] %v267
    %341 = vst [vmem:[#allocation2 + $0xf8] sm:$0xff] %v308
    %v342 = vld [vmem:[#allocation2] sm:$0xff]
    %v343 = vld [vmem:[#allocation2 + $0x8] sm:$0xff]
    %v344 = vld [vmem:[#allocation2 + $0x10] sm:$0xff]
    %v345 = vld [vmem:[#allocation2 + $0x18] sm:$0xff]
    %v346 = vld [vmem:[#allocation8] sm:$0xff]
    %v347 = vld [vmem:[#allocation8 + $0x8] sm:$0xff]
    %v348 = vld [vmem:[#allocation8 + $0x10] sm:$0xff]
    %v349 = vld [vmem:[#allocation8 + $0x18] sm:$0xff]
    %v350 = vld [vmem:[#allocation8 + $0x20] sm:$0xff]
    %v351 = vld [vmem:[#allocation8 + $0x28] sm:$0xff]
    %v352 = vld [vmem:[#allocation8 + $0x30] sm:$0xff]
    %v353 = vld [vmem:[#allocation8 + $0x38] sm:$0xff]
    %v354 = vld [vmem:[#allocation8 + $0x40] sm:$0xff]
    %v355 = vld [vmem:[#allocation8 + $0x48] sm:$0xff]
    %v356 = vld [vmem:[#allocation8 + $0x50] sm:$0xff]
    %v357 = vld [vmem:[#allocation8 + $0x58] sm:$0xff]
    %v358 = vld [vmem:[#allocation8 + $0x60] sm:$0xff]
    %v359 = vld [vmem:[#allocation8 + $0x68] sm:$0xff]
    %v360 = vld [vmem:[#allocation8 + $0x70] sm:$0xff]
    %v361 = vld [vmem:[#allocation8 + $0x78] sm:$0xff]
    %v362 = vld [vmem:[#allocation8 + $0x80] sm:$0xff]
    %v363 = vld [vmem:[#allocation8 + $0x88] sm:$0xff]
    %v364 = vld [vmem:[#allocation8 + $0x90] sm:$0xff]
    %v365 = vld [vmem:[#allocation8 + $0x98] sm:$0xff]
    %v366 = vld [vmem:[#allocation8 + $0xa0] sm:$0xff]
    %v367 = vld [vmem:[#allocation8 + $0xa8] sm:$0xff]
    %v368 = vld [vmem:[#allocation8 + $0xb0] sm:$0xff]
    %v369 = vld [vmem:[#allocation8 + $0xb8] sm:$0xff]
    %v370 = vld [vmem:[#allocation8 + $0xc0] sm:$0xff]
    %v371 = vld [vmem:[#allocation8 + $0xc8] sm:$0xff]
    %v372 = vld [vmem:[#allocation8 + $0xd0] sm:$0xff]
    %v373 = vld [vmem:[#allocation8 + $0xd8] sm:$0xff]
    %v374 = vld [vmem:[#allocation8 + $0xe0] sm:$0xff]
    %v375 = vld [vmem:[#allocation8 + $0xe8] sm:$0xff]
    %v376 = vld [vmem:[#allocation8 + $0xf0] sm:$0xff]
    %v377 = vld [vmem:[#allocation8 + $0xf8] sm:$0xff]
    %v410 = vunpack.c.l.b16 %v346
    %v411 = vunpack.c.h.b16 %v346
    %v412 = vunpack.c.l.b16 %v347
    %v413 = vunpack.c.h.b16 %v347
    %v414 = vunpack.c.l.b16 %v348
    %v415 = vunpack.c.h.b16 %v348
    %v416 = vunpack.c.l.b16 %v349
    %v417 = vunpack.c.h.b16 %v349
    %v418 = vunpack.c.l.b16 %v350
    %v419 = vunpack.c.h.b16 %v350
    %v420 = vunpack.c.l.b16 %v351
    %v421 = vunpack.c.h.b16 %v351
    %v422 = vunpack.c.l.b16 %v352
    %v423 = vunpack.c.h.b16 %v352
    %v424 = vunpack.c.l.b16 %v353
    %v425 = vunpack.c.h.b16 %v353
    %v426 = vunpack.c.l.b16 %v354
    %v427 = vunpack.c.h.b16 %v354
    %v428 = vunpack.c.l.b16 %v355
    %v429 = vunpack.c.h.b16 %v355
    %v430 = vunpack.c.l.b16 %v356
    %v431 = vunpack.c.h.b16 %v356
    %v432 = vunpack.c.l.b16 %v357
    %v433 = vunpack.c.h.b16 %v357
    %v434 = vunpack.c.l.b16 %v358
    %v435 = vunpack.c.h.b16 %v358
    %v436 = vunpack.c.l.b16 %v359
    %v437 = vunpack.c.h.b16 %v359
    %v438 = vunpack.c.l.b16 %v360
    %v439 = vunpack.c.h.b16 %v360
    %v440 = vunpack.c.l.b16 %v361
    %v441 = vunpack.c.h.b16 %v361
    %v442 = vunpack.c.l.b16 %v362
    %v443 = vunpack.c.h.b16 %v362
    %v444 = vunpack.c.l.b16 %v363
    %v445 = vunpack.c.h.b16 %v363
    %v446 = vunpack.c.l.b16 %v364
    %v447 = vunpack.c.h.b16 %v364
    %v448 = vunpack.c.l.b16 %v365
    %v449 = vunpack.c.h.b16 %v365
    %v450 = vunpack.c.l.b16 %v366
    %v451 = vunpack.c.h.b16 %v366
    %v452 = vunpack.c.l.b16 %v367
    %v453 = vunpack.c.h.b16 %v367
    %v454 = vunpack.c.l.b16 %v368
    %v455 = vunpack.c.h.b16 %v368
    %v456 = vunpack.c.l.b16 %v369
    %v457 = vunpack.c.h.b16 %v369
    %v458 = vunpack.c.l.b16 %v370
    %v459 = vunpack.c.h.b16 %v370
    %v460 = vunpack.c.l.b16 %v371
    %v461 = vunpack.c.h.b16 %v371
    %v462 = vunpack.c.l.b16 %v372
    %v463 = vunpack.c.h.b16 %v372
    %v464 = vunpack.c.l.b16 %v373
    %v465 = vunpack.c.h.b16 %v373
    %v466 = vunpack.c.l.b16 %v374
    %v467 = vunpack.c.h.b16 %v374
    %v468 = vunpack.c.l.b16 %v375
    %v469 = vunpack.c.h.b16 %v375
    %v470 = vunpack.c.l.b16 %v376
    %v471 = vunpack.c.h.b16 %v376
    %v472 = vunpack.c.l.b16 %v377
    %v473 = vunpack.c.h.b16 %v377
    %v474 = vpack.c.b16 %v414, %v410
    %v475 = vpack.c.b16 %v415, %v411
    %v476 = vpack.c.b16 %v416, %v412
    %v477 = vpack.c.b16 %v417, %v413
    %v478 = vpack.c.b16 %v422, %v418
    %v479 = vpack.c.b16 %v423, %v419
    %v480 = vpack.c.b16 %v424, %v420
    %v481 = vpack.c.b16 %v425, %v421
    %v482 = vpack.c.b16 %v430, %v426
    %v483 = vpack.c.b16 %v431, %v427
    %v484 = vpack.c.b16 %v432, %v428
    %v485 = vpack.c.b16 %v433, %v429
    %v486 = vpack.c.b16 %v438, %v434
    %v487 = vpack.c.b16 %v439, %v435
    %v488 = vpack.c.b16 %v440, %v436
    %v489 = vpack.c.b16 %v441, %v437
    %v490 = vpack.c.b16 %v446, %v442
    %v491 = vpack.c.b16 %v447, %v443
    %v492 = vpack.c.b16 %v448, %v444
    %v493 = vpack.c.b16 %v449, %v445
    %v494 = vpack.c.b16 %v454, %v450
    %v495 = vpack.c.b16 %v455, %v451
    %v496 = vpack.c.b16 %v456, %v452
    %v497 = vpack.c.b16 %v457, %v453
    %v498 = vpack.c.b16 %v462, %v458
    %v499 = vpack.c.b16 %v463, %v459
    %v500 = vpack.c.b16 %v464, %v460
    %v501 = vpack.c.b16 %v465, %v461
    %v502 = vpack.c.b16 %v470, %v466
    %v503 = vpack.c.b16 %v471, %v467
    %v504 = vpack.c.b16 %v472, %v468
    %v505 = vpack.c.b16 %v473, %v469
    %538 = vmatpush.bf16.msra.mxu0 %v502
    %539 = vmatpush.bf16.msra.mxu0 %v498
    %540 = vmatpush.bf16.msra.mxu0 %v494
    %541 = vmatpush.bf16.msra.mxu0 %v490
    %542 = vmatpush.bf16.msra.mxu0 %v486
    %543 = vmatpush.bf16.msra.mxu0 %v482
    %544 = vmatpush.bf16.msra.mxu0 %v478
    %545 = vmatpush.bf16.msra.mxu0 %v474
    %546 = vmatmul.bf16.gmra.mxu0 0
    %v547 = vpop.f32.mrf.mxu0
    %v548 = vadd.f32 0.0, %v547
    %v549 = vpop.f32.mrf.mxu0
    %550 = vdwg.mxu0
    %551 = vmatpush.bf16.msra.mxu0 %v503
    %552 = vmatpush.bf16.msra.mxu0 %v499
    %553 = vmatpush.bf16.msra.mxu0 %v495
    %554 = vmatpush.bf16.msra.mxu0 %v491
    %555 = vmatpush.bf16.msra.mxu0 %v487
    %556 = vmatpush.bf16.msra.mxu0 %v483
    %557 = vmatpush.bf16.msra.mxu0 %v479
    %558 = vmatpush.bf16.msra.mxu0 %v475
    %559 = vmatmul.bf16.gmra.mxu0 0
    %v560 = vpop.f32.mrf.mxu0
    %v561 = vadd.f32 0.0, %v560
    %v562 = vpop.f32.mrf.mxu0
    %563 = vdwg.mxu0
    %564 = vmatpush.bf16.msra.mxu0 %v504
    %565 = vmatpush.bf16.msra.mxu0 %v500
    %566 = vmatpush.bf16.msra.mxu0 %v496
    %567 = vmatpush.bf16.msra.mxu0 %v492
    %568 = vmatpush.bf16.msra.mxu0 %v488
    %569 = vmatpush.bf16.msra.mxu0 %v484
    %570 = vmatpush.bf16.msra.mxu0 %v480
    %571 = vmatpush.bf16.msra.mxu0 %v476
    %572 = vmatmul.bf16.gmra.mxu0 0
    %v573 = vpop.f32.mrf.mxu0
    %v574 = vadd.f32 0.0, %v573
    %v575 = vpop.f32.mrf.mxu0
    %576 = vdwg.mxu0
    %577 = vmatpush.bf16.msra.mxu0 %v505
    %578 = vmatpush.bf16.msra.mxu0 %v501
    %579 = vmatpush.bf16.msra.mxu0 %v497
    %580 = vmatpush.bf16.msra.mxu0 %v493
    %581 = vmatpush.bf16.msra.mxu0 %v489
    %582 = vmatpush.bf16.msra.mxu0 %v485
    %583 = vmatpush.bf16.msra.mxu0 %v481
    %584 = vmatpush.bf16.msra.mxu0 %v477
    %585 = vmatmul.bf16.gmra.mxu0 0
    %v586 = vpop.f32.mrf.mxu0
    %v587 = vadd.f32 0.0, %v586
    %v588 = vpop.f32.mrf.mxu0
    %589 = vdwg.mxu0
    %v590 = vadd.f32 %v342, %v548
    %v591 = vadd.f32 %v343, %v561
    %v592 = vadd.f32 %v344, %v574
    %v593 = vadd.f32 %v345, %v587
    %v594 = vxor.u32 %v590, 2147483648
    %v595 = vmul.f32 %v594, 1.442695
    %v596 = vpow.pop %v595
    %v597 = vadd.f32 %v596, 1.0
    %v598 = vrcp.pop %v597
    %v599 = vmul.f32 %v597, %v598
    %v600 = vsub.f32 1.0, %v599
    %v601 = vmul.f32 %v598, %v600
    %v602 = vadd.f32 %v598, %v601
    %vm603 = vweird.f32 %v597
    %vm604 = vweird.f32 %v598
    %vm605 = vmor %vm603, %vm604
    %v606 = vsel %vm605, %v598, %v602
    %v607 = vand.u32 2147483647, %v597
    %vm608 = vcmp.eq.f32.partialorder %v607, 8.507059e+37
    %v609 = vand.u32 %v597, 2147483648
    %v610 = vor.u32 1.1754944e-38, %v609
    %v611 = vsel %vm608, %v610, %v606
    %v612 = vmul.f32 1.0, %v611
    %v613 = vxor.u32 %v591, 2147483648
    %v614 = vmul.f32 %v613, 1.442695
    %v615 = vpow.pop %v614
    %v616 = vadd.f32 %v615, 1.0
    %v617 = vrcp.pop %v616
    %v618 = vmul.f32 %v616, %v617
    %v619 = vsub.f32 1.0, %v618
    %v620 = vmul.f32 %v617, %v619
    %v621 = vadd.f32 %v617, %v620
    %vm622 = vweird.f32 %v616
    %vm623 = vweird.f32 %v617
    %vm624 = vmor %vm622, %vm623
    %v625 = vsel %vm624, %v617, %v621
    %v626 = vand.u32 2147483647, %v616
    %vm627 = vcmp.eq.f32.partialorder %v626, 8.507059e+37
    %v628 = vand.u32 %v616, 2147483648
    %v629 = vor.u32 1.1754944e-38, %v628
    %v630 = vsel %vm627, %v629, %v625
    %v631 = vmul.f32 1.0, %v630
    %v632 = vtanh.pop %v592
    %v633 = vxor.u32 %v593, 2147483648
    %v634 = vmul.f32 %v633, 1.442695
    %v635 = vpow.pop %v634
    %v636 = vadd.f32 %v635, 1.0
    %v637 = vrcp.pop %v636
    %v638 = vmul.f32 %v636, %v637
    %v639 = vsub.f32 1.0, %v638
    %v640 = vmul.f32 %v637, %v639
    %v641 = vadd.f32 %v637, %v640
    %vm642 = vweird.f32 %v636
    %vm643 = vweird.f32 %v637
    %vm644 = vmor %vm642, %vm643
    %v645 = vsel %vm644, %v637, %v641
    %v646 = vand.u32 2147483647, %v636
    %vm647 = vcmp.eq.f32.partialorder %v646, 8.507059e+37
    %v648 = vand.u32 %v636, 2147483648
    %v649 = vor.u32 1.1754944e-38, %v648
    %v650 = vsel %vm647, %v649, %v645
    %v651 = vmul.f32 1.0, %v650
    %v652 = vmul.f32 %v631, 0.0
    %v653 = vmul.f32 %v612, %v632
    %v654 = vadd.f32 %v652, %v653
    %v655 = vtanh.pop %v654
    %v656 = vmul.f32 %v651, %v655
    %v657 = vld [vmem:[#allocation2 + $0x20] sm:$0xff]
    %v658 = vld [vmem:[#allocation2 + $0x28] sm:$0xff]
    %v659 = vld [vmem:[#allocation2 + $0x30] sm:$0xff]
    %v660 = vld [vmem:[#allocation2 + $0x38] sm:$0xff]
    %v661 = vpack.c.bf16 %v656, %v656
    %662 = vmatpush.bf16.msra.mxu0 %v502
    %663 = vmatpush.bf16.msra.mxu0 %v498
    %664 = vmatpush.bf16.msra.mxu0 %v494
    %665 = vmatpush.bf16.msra.mxu0 %v490
    %666 = vmatpush.bf16.msra.mxu0 %v486
    %667 = vmatpush.bf16.msra.mxu0 %v482
    %668 = vmatpush.bf16.msra.mxu0 %v478
    %669 = vmatpush.bf16.msra.mxu0 %v474
    %670 = vmatmul.bf16.gmra.mxu0 %v661
    %v671 = vpop.f32.mrf.mxu0
    %v672 = vadd.f32 0.0, %v671
    %v673 = vpop.f32.mrf.mxu0
    %674 = vdwg.mxu0
    %675 = vmatpush.bf16.msra.mxu0 %v503
    %676 = vmatpush.bf16.msra.mxu0 %v499
    %677 = vmatpush.bf16.msra.mxu0 %v495
    %678 = vmatpush.bf16.msra.mxu0 %v491
    %679 = vmatpush.bf16.msra.mxu0 %v487
    %680 = vmatpush.bf16.msra.mxu0 %v483
    %681 = vmatpush.bf16.msra.mxu0 %v479
    %682 = vmatpush.bf16.msra.mxu0 %v475
    %683 = vmatmul.bf16.gmra.mxu0 %v661
    %v684 = vpop.f32.mrf.mxu0
    %v685 = vadd.f32 0.0, %v684
    %v686 = vpop.f32.mrf.mxu0
    %687 = vdwg.mxu0
    %688 = vmatpush.bf16.msra.mxu0 %v504
    %689 = vmatpush.bf16.msra.mxu0 %v500
    %690 = vmatpush.bf16.msra.mxu0 %v496
    %691 = vmatpush.bf16.msra.mxu0 %v492
    %692 = vmatpush.bf16.msra.mxu0 %v488
    %693 = vmatpush.bf16.msra.mxu0 %v484
    %694 = vmatpush.bf16.msra.mxu0 %v480
    %695 = vmatpush.bf16.msra.mxu0 %v476
    %696 = vmatmul.bf16.gmra.mxu0 %v661
    %v697 = vpop.f32.mrf.mxu0
    %v698 = vadd.f32 0.0, %v697
    %v699 = vpop.f32.mrf.mxu0
    %700 = vdwg.mxu0
    %701 = vmatpush.bf16.msra.mxu0 %v505
    %702 = vmatpush.bf16.msra.mxu0 %v501
    %703 = vmatpush.bf16.msra.mxu0 %v497
    %704 = vmatpush.bf16.msra.mxu0 %v493
    %705 = vmatpush.bf16.msra.mxu0 %v489
    %706 = vmatpush.bf16.msra.mxu0 %v485
    %707 = vmatpush.bf16.msra.mxu0 %v481
    %708 = vmatpush.bf16.msra.mxu0 %v477
    %709 = vmatmul.bf16.gmra.mxu0 %v661
    %v710 = vpop.f32.mrf.mxu0
    %v711 = vadd.f32 0.0, %v710
    %v712 = vpop.f32.mrf.mxu0
    %713 = vdwg.mxu0
    %v714 = vadd.f32 %v657, %v672
    %v715 = vadd.f32 %v658, %v685
    %v716 = vadd.f32 %v659, %v698
    %v717 = vadd.f32 %v660, %v711
    %v718 = vxor.u32 %v714, 2147483648
    %v719 = vmul.f32 %v718, 1.442695
    %v720 = vpow.pop %v719
    %v721 = vadd.f32 %v720, 1.0
    %v722 = vrcp.pop %v721
    %v723 = vmul.f32 %v721, %v722
    %v724 = vsub.f32 1.0, %v723
    %v725 = vmul.f32 %v722, %v724
    %v726 = vadd.f32 %v722, %v725
    %vm727 = vweird.f32 %v721
    %vm728 = vweird.f32 %v722
    %vm729 = vmor %vm727, %vm728
    %v730 = vsel %vm729, %v722, %v726
    %v731 = vand.u32 2147483647, %v721
    %vm732 = vcmp.eq.f32.partialorder %v731, 8.507059e+37
    %v733 = vand.u32 %v721, 2147483648
    %v734 = vor.u32 1.1754944e-38, %v733
    %v735 = vsel %vm732, %v734, %v730
    %v736 = vmul.f32 1.0, %v735
    %v737 = vxor.u32 %v715, 2147483648
    %v738 = vmul.f32 %v737, 1.442695
    %v739 = vpow.pop %v738
    %v740 = vadd.f32 %v739, 1.0
    %v741 = vrcp.pop %v740
    %v742 = vmul.f32 %v740, %v741
    %v743 = vsub.f32 1.0, %v742
    %v744 = vmul.f32 %v741, %v743
    %v745 = vadd.f32 %v741, %v744
    %vm746 = vweird.f32 %v740
    %vm747 = vweird.f32 %v741
    %vm748 = vmor %vm746, %vm747
    %v749 = vsel %vm748, %v741, %v745
    %v750 = vand.u32 2147483647, %v740
    %vm751 = vcmp.eq.f32.partialorder %v750, 8.507059e+37
    %v752 = vand.u32 %v740, 2147483648
    %v753 = vor.u32 1.1754944e-38, %v752
    %v754 = vsel %vm751, %v753, %v749
    %v755 = vmul.f32 1.0, %v754
    %v756 = vtanh.pop %v716
    %v757 = vxor.u32 %v717, 2147483648
    %v758 = vmul.f32 %v757, 1.442695
    %v759 = vpow.pop %v758
    %v760 = vadd.f32 %v759, 1.0
    %v761 = vrcp.pop %v760
    %v762 = vmul.f32 %v760, %v761
    %v763 = vsub.f32 1.0, %v762
    %v764 = vmul.f32 %v761, %v763
    %v765 = vadd.f32 %v761, %v764
    %vm766 = vweird.f32 %v760
    %vm767 = vweird.f32 %v761
    %vm768 = vmor %vm766, %vm767
    %v769 = vsel %vm768, %v761, %v765
    %v770 = vand.u32 2147483647, %v760
    %vm771 = vcmp.eq.f32.partialorder %v770, 8.507059e+37
    %v772 = vand.u32 %v760, 2147483648
    %v773 = vor.u32 1.1754944e-38, %v772
    %v774 = vsel %vm771, %v773, %v769
    %v775 = vmul.f32 1.0, %v774
    %v776 = vmul.f32 %v755, %v654
    %v777 = vmul.f32 %v736, %v756
    %v778 = vadd.f32 %v776, %v777
    %v779 = vtanh.pop %v778
    %v780 = vmul.f32 %v775, %v779
    %v781 = vld [vmem:[#allocation2 + $0x40] sm:$0xff]
    %v782 = vld [vmem:[#allocation2 + $0x48] sm:$0xff]
    %v783 = vld [vmem:[#allocation2 + $0x50] sm:$0xff]
    %v784 = vld [vmem:[#allocation2 + $0x58] sm:$0xff]
    %v785 = vpack.c.bf16 %v780, %v780
    %786 = vmatpush.bf16.msra.mxu0 %v502
    %787 = vmatpush.bf16.msra.mxu0 %v498
    %788 = vmatpush.bf16.msra.mxu0 %v494
    %789 = vmatpush.bf16.msra.mxu0 %v490
    %790 = vmatpush.bf16.msra.mxu0 %v486
    %791 = vmatpush.bf16.msra.mxu0 %v482
    %792 = vmatpush.bf16.msra.mxu0 %v478
    %793 = vmatpush.bf16.msra.mxu0 %v474
    %794 = vmatmul.bf16.gmra.mxu0 %v785
    %v795 = vpop.f32.mrf.mxu0
    %v796 = vadd.f32 0.0, %v795
    %v797 = vpop.f32.mrf.mxu0
    %798 = vdwg.mxu0
    %799 = vmatpush.bf16.msra.mxu0 %v503
    %800 = vmatpush.bf16.msra.mxu0 %v499
    %801 = vmatpush.bf16.msra.mxu0 %v495
    %802 = vmatpush.bf16.msra.mxu0 %v491
    %803 = vmatpush.bf16.msra.mxu0 %v487
    %804 = vmatpush.bf16.msra.mxu0 %v483
    %805 = vmatpush.bf16.msra.mxu0 %v479
    %806 = vmatpush.bf16.msra.mxu0 %v475
    %807 = vmatmul.bf16.gmra.mxu0 %v785
    %v808 = vpop.f32.mrf.mxu0
    %v809 = vadd.f32 0.0, %v808
    %v810 = vpop.f32.mrf.mxu0
    %811 = vdwg.mxu0
    %812 = vmatpush.bf16.msra.mxu0 %v504
    %813 = vmatpush.bf16.msra.mxu0 %v500
    %814 = vmatpush.bf16.msra.mxu0 %v496
    %815 = vmatpush.bf16.msra.mxu0 %v492
    %816 = vmatpush.bf16.msra.mxu0 %v488
    %817 = vmatpush.bf16.msra.mxu0 %v484
    %818 = vmatpush.bf16.msra.mxu0 %v480
    %819 = vmatpush.bf16.msra.mxu0 %v476
    %820 = vmatmul.bf16.gmra.mxu0 %v785
    %v821 = vpop.f32.mrf.mxu0
    %v822 = vadd.f32 0.0, %v821
    %v823 = vpop.f32.mrf.mxu0
    %824 = vdwg.mxu0
    %825 = vmatpush.bf16.msra.mxu0 %v505
    %826 = vmatpush.bf16.msra.mxu0 %v501
    %827 = vmatpush.bf16.msra.mxu0 %v497
    %828 = vmatpush.bf16.msra.mxu0 %v493
    %829 = vmatpush.bf16.msra.mxu0 %v489
    %830 = vmatpush.bf16.msra.mxu0 %v485
    %831 = vmatpush.bf16.msra.mxu0 %v481
    %832 = vmatpush.bf16.msra.mxu0 %v477
    %833 = vmatmul.bf16.gmra.mxu0 %v785
    %v834 = vpop.f32.mrf.mxu0
    %v835 = vadd.f32 0.0, %v834
    %v836 = vpop.f32.mrf.mxu0
    %837 = vdwg.mxu0
    %v838 = vadd.f32 %v781, %v796
    %v839 = vadd.f32 %v782, %v809
    %v840 = vadd.f32 %v783, %v822
    %v841 = vadd.f32 %v784, %v835
    %v842 = vxor.u32 %v838, 2147483648
    %v843 = vmul.f32 %v842, 1.442695
    %v844 = vpow.pop %v843
    %v845 = vadd.f32 %v844, 1.0
    %v846 = vrcp.pop %v845
    %v847 = vmul.f32 %v845, %v846
    %v848 = vsub.f32 1.0, %v847
    %v849 = vmul.f32 %v846, %v848
    %v850 = vadd.f32 %v846, %v849
    %vm851 = vweird.f32 %v845
    %vm852 = vweird.f32 %v846
    %vm853 = vmor %vm851, %vm852
    %v854 = vsel %vm853, %v846, %v850
    %v855 = vand.u32 2147483647, %v845
    %vm856 = vcmp.eq.f32.partialorder %v855, 8.507059e+37
    %v857 = vand.u32 %v845, 2147483648
    %v858 = vor.u32 1.1754944e-38, %v857
    %v859 = vsel %vm856, %v858, %v854
    %v860 = vmul.f32 1.0, %v859
    %v861 = vxor.u32 %v839, 2147483648
    %v862 = vmul.f32 %v861, 1.442695
    %v863 = vpow.pop %v862
    %v864 = vadd.f32 %v863, 1.0
    %v865 = vrcp.pop %v864
    %v866 = vmul.f32 %v864, %v865
    %v867 = vsub.f32 1.0, %v866
    %v868 = vmul.f32 %v865, %v867
    %v869 = vadd.f32 %v865, %v868
    %vm870 = vweird.f32 %v864
    %vm871 = vweird.f32 %v865
    %vm872 = vmor %vm870, %vm871
    %v873 = vsel %vm872, %v865, %v869
    %v874 = vand.u32 2147483647, %v864
    %vm875 = vcmp.eq.f32.partialorder %v874, 8.507059e+37
    %v876 = vand.u32 %v864, 2147483648
    %v877 = vor.u32 1.1754944e-38, %v876
    %v878 = vsel %vm875, %v877, %v873
    %v879 = vmul.f32 1.0, %v878
    %v880 = vtanh.pop %v840
    %v881 = vxor.u32 %v841, 2147483648
    %v882 = vmul.f32 %v881, 1.442695
    %v883 = vpow.pop %v882
    %v884 = vadd.f32 %v883, 1.0
    %v885 = vrcp.pop %v884
    %v886 = vmul.f32 %v884, %v885
    %v887 = vsub.f32 1.0, %v886
    %v888 = vmul.f32 %v885, %v887
    %v889 = vadd.f32 %v885, %v888
    %vm890 = vweird.f32 %v884
    %vm891 = vweird.f32 %v885
    %vm892 = vmor %vm890, %vm891
    %v893 = vsel %vm892, %v885, %v889
    %v894 = vand.u32 2147483647, %v884
    %vm895 = vcmp.eq.f32.partialorder %v894, 8.507059e+37
    %v896 = vand.u32 %v884, 2147483648
    %v897 = vor.u32 1.1754944e-38, %v896
    %v898 = vsel %vm895, %v897, %v893
    %v899 = vmul.f32 1.0, %v898
    %v900 = vmul.f32 %v879, %v778
    %v901 = vmul.f32 %v860, %v880
    %v902 = vadd.f32 %v900, %v901
    %v903 = vtanh.pop %v902
    %v904 = vmul.f32 %v899, %v903
    %v905 = vld [vmem:[#allocation2 + $0x60] sm:$0xff]
    %v906 = vld [vmem:[#allocation2 + $0x68] sm:$0xff]
    %v907 = vld [vmem:[#allocation2 + $0x70] sm:$0xff]
    %v908 = vld [vmem:[#allocation2 + $0x78] sm:$0xff]
    %v909 = vpack.c.bf16 %v904, %v904
    %910 = vmatpush.bf16.msra.mxu0 %v502
    %911 = vmatpush.bf16.msra.mxu0 %v498
    %912 = vmatpush.bf16.msra.mxu0 %v494
    %913 = vmatpush.bf16.msra.mxu0 %v490
    %914 = vmatpush.bf16.msra.mxu0 %v486
    %915 = vmatpush.bf16.msra.mxu0 %v482
    %916 = vmatpush.bf16.msra.mxu0 %v478
    %917 = vmatpush.bf16.msra.mxu0 %v474
    %918 = vmatmul.bf16.gmra.mxu0 %v909
    %v919 = vpop.f32.mrf.mxu0
    %v920 = vadd.f32 0.0, %v919
    %v921 = vpop.f32.mrf.mxu0
    %922 = vdwg.mxu0
    %923 = vmatpush.bf16.msra.mxu0 %v503
    %924 = vmatpush.bf16.msra.mxu0 %v499
    %925 = vmatpush.bf16.msra.mxu0 %v495
    %926 = vmatpush.bf16.msra.mxu0 %v491
    %927 = vmatpush.bf16.msra.mxu0 %v487
    %928 = vmatpush.bf16.msra.mxu0 %v483
    %929 = vmatpush.bf16.msra.mxu0 %v479
    %930 = vmatpush.bf16.msra.mxu0 %v475
    %931 = vmatmul.bf16.gmra.mxu0 %v909
    %v932 = vpop.f32.mrf.mxu0
    %v933 = vadd.f32 0.0, %v932
    %v934 = vpop.f32.mrf.mxu0
    %935 = vdwg.mxu0
    %936 = vmatpush.bf16.msra.mxu0 %v504
    %937 = vmatpush.bf16.msra.mxu0 %v500
    %938 = vmatpush.bf16.msra.mxu0 %v496
    %939 = vmatpush.bf16.msra.mxu0 %v492
    %940 = vmatpush.bf16.msra.mxu0 %v488
    %941 = vmatpush.bf16.msra.mxu0 %v484
    %942 = vmatpush.bf16.msra.mxu0 %v480
    %943 = vmatpush.bf16.msra.mxu0 %v476
    %944 = vmatmul.bf16.gmra.mxu0 %v909
    %v945 = vpop.f32.mrf.mxu0
    %v946 = vadd.f32 0.0, %v945
    %v947 = vpop.f32.mrf.mxu0
    %948 = vdwg.mxu0
    %949 = vmatpush.bf16.msra.mxu0 %v505
    %950 = vmatpush.bf16.msra.mxu0 %v501
    %951 = vmatpush.bf16.msra.mxu0 %v497
    %952 = vmatpush.bf16.msra.mxu0 %v493
    %953 = vmatpush.bf16.msra.mxu0 %v489
    %954 = vmatpush.bf16.msra.mxu0 %v485
    %955 = vmatpush.bf16.msra.mxu0 %v481
    %956 = vmatpush.bf16.msra.mxu0 %v477
    %957 = vmatmul.bf16.gmra.mxu0 %v909
    %v958 = vpop.f32.mrf.mxu0
    %v959 = vadd.f32 0.0, %v958
    %v960 = vpop.f32.mrf.mxu0
    %961 = vdwg.mxu0
    %v962 = vadd.f32 %v905, %v920
    %v963 = vadd.f32 %v906, %v933
    %v964 = vadd.f32 %v907, %v946
    %v965 = vadd.f32 %v908, %v959
    %v966 = vxor.u32 %v962, 2147483648
    %v967 = vmul.f32 %v966, 1.442695
    %v968 = vpow.pop %v967
    %v969 = vadd.f32 %v968, 1.0
    %v970 = vrcp.pop %v969
    %v971 = vmul.f32 %v969, %v970
    %v972 = vsub.f32 1.0, %v971
    %v973 = vmul.f32 %v970, %v972
    %v974 = vadd.f32 %v970, %v973
    %vm975 = vweird.f32 %v969
    %vm976 = vweird.f32 %v970
    %vm977 = vmor %vm975, %vm976
    %v978 = vsel %vm977, %v970, %v974
    %v979 = vand.u32 2147483647, %v969
    %vm980 = vcmp.eq.f32.partialorder %v979, 8.507059e+37
    %v981 = vand.u32 %v969, 2147483648
    %v982 = vor.u32 1.1754944e-38, %v981
    %v983 = vsel %vm980, %v982, %v978
    %v984 = vmul.f32 1.0, %v983
    %v985 = vxor.u32 %v963, 2147483648
    %v986 = vmul.f32 %v985, 1.442695
    %v987 = vpow.pop %v986
    %v988 = vadd.f32 %v987, 1.0
    %v989 = vrcp.pop %v988
    %v990 = vmul.f32 %v988, %v989
    %v991 = vsub.f32 1.0, %v990
    %v992 = vmul.f32 %v989, %v991
    %v993 = vadd.f32 %v989, %v992
    %vm994 = vweird.f32 %v988
    %vm995 = vweird.f32 %v989
    %vm996 = vmor %vm994, %vm995
    %v997 = vsel %vm996, %v989, %v993
    %v998 = vand.u32 2147483647, %v988
    %vm999 = vcmp.eq.f32.partialorder %v998, 8.507059e+37
    %v1000 = vand.u32 %v988, 2147483648
    %v1001 = vor.u32 1.1754944e-38, %v1000
    %v1002 = vsel %vm999, %v1001, %v997
    %v1003 = vmul.f32 1.0, %v1002
    %v1004 = vtanh.pop %v964
    %v1005 = vxor.u32 %v965, 2147483648
    %v1006 = vmul.f32 %v1005, 1.442695
    %v1007 = vpow.pop %v1006
    %v1008 = vadd.f32 %v1007, 1.0
    %v1009 = vrcp.pop %v1008
    %v1010 = vmul.f32 %v1008, %v1009
    %v1011 = vsub.f32 1.0, %v1010
    %v1012 = vmul.f32 %v1009, %v1011
    %v1013 = vadd.f32 %v1009, %v1012
    %vm1014 = vweird.f32 %v1008
    %vm1015 = vweird.f32 %v1009
    %vm1016 = vmor %vm1014, %vm1015
    %v1017 = vsel %vm1016, %v1009, %v1013
    %v1018 = vand.u32 2147483647, %v1008
    %vm1019 = vcmp.eq.f32.partialorder %v1018, 8.507059e+37
    %v1020 = vand.u32 %v1008, 2147483648
    %v1021 = vor.u32 1.1754944e-38, %v1020
    %v1022 = vsel %vm1019, %v1021, %v1017
    %v1023 = vmul.f32 1.0, %v1022
    %v1024 = vmul.f32 %v1003, %v902
    %v1025 = vmul.f32 %v984, %v1004
    %v1026 = vadd.f32 %v1024, %v1025
    %v1027 = vtanh.pop %v1026
    %v1028 = vmul.f32 %v1023, %v1027
    %v1029 = vld [vmem:[#allocation2 + $0x80] sm:$0xff]
    %v1030 = vld [vmem:[#allocation2 + $0x88] sm:$0xff]
    %v1031 = vld [vmem:[#allocation2 + $0x90] sm:$0xff]
    %v1032 = vld [vmem:[#allocation2 + $0x98] sm:$0xff]
    %v1033 = vpack.c.bf16 %v1028, %v1028
    %1034 = vmatpush.bf16.msra.mxu0 %v502
    %1035 = vmatpush.bf16.msra.mxu0 %v498
    %1036 = vmatpush.bf16.msra.mxu0 %v494
    %1037 = vmatpush.bf16.msra.mxu0 %v490
    %1038 = vmatpush.bf16.msra.mxu0 %v486
    %1039 = vmatpush.bf16.msra.mxu0 %v482
    %1040 = vmatpush.bf16.msra.mxu0 %v478
    %1041 = vmatpush.bf16.msra.mxu0 %v474
    %1042 = vmatmul.bf16.gmra.mxu0 %v1033
    %v1043 = vpop.f32.mrf.mxu0
    %v1044 = vadd.f32 0.0, %v1043
    %v1045 = vpop.f32.mrf.mxu0
    %1046 = vdwg.mxu0
    %1047 = vmatpush.bf16.msra.mxu0 %v503
    %1048 = vmatpush.bf16.msra.mxu0 %v499
    %1049 = vmatpush.bf16.msra.mxu0 %v495
    %1050 = vmatpush.bf16.msra.mxu0 %v491
    %1051 = vmatpush.bf16.msra.mxu0 %v487
    %1052 = vmatpush.bf16.msra.mxu0 %v483
    %1053 = vmatpush.bf16.msra.mxu0 %v479
    %1054 = vmatpush.bf16.msra.mxu0 %v475
    %1055 = vmatmul.bf16.gmra.mxu0 %v1033
    %v1056 = vpop.f32.mrf.mxu0
    %v1057 = vadd.f32 0.0, %v1056
    %v1058 = vpop.f32.mrf.mxu0
    %1059 = vdwg.mxu0
    %1060 = vmatpush.bf16.msra.mxu0 %v504
    %1061 = vmatpush.bf16.msra.mxu0 %v500
    %1062 = vmatpush.bf16.msra.mxu0 %v496
    %1063 = vmatpush.bf16.msra.mxu0 %v492
    %1064 = vmatpush.bf16.msra.mxu0 %v488
    %1065 = vmatpush.bf16.msra.mxu0 %v484
    %1066 = vmatpush.bf16.msra.mxu0 %v480
    %1067 = vmatpush.bf16.msra.mxu0 %v476
    %1068 = vmatmul.bf16.gmra.mxu0 %v1033
    %v1069 = vpop.f32.mrf.mxu0
    %v1070 = vadd.f32 0.0, %v1069
    %v1071 = vpop.f32.mrf.mxu0
    %1072 = vdwg.mxu0
    %1073 = vmatpush.bf16.msra.mxu0 %v505
    %1074 = vmatpush.bf16.msra.mxu0 %v501
    %1075 = vmatpush.bf16.msra.mxu0 %v497
    %1076 = vmatpush.bf16.msra.mxu0 %v493
    %1077 = vmatpush.bf16.msra.mxu0 %v489
    %1078 = vmatpush.bf16.msra.mxu0 %v485
    %1079 = vmatpush.bf16.msra.mxu0 %v481
    %1080 = vmatpush.bf16.msra.mxu0 %v477
    %1081 = vmatmul.bf16.gmra.mxu0 %v1033
    %v1082 = vpop.f32.mrf.mxu0
    %v1083 = vadd.f32 0.0, %v1082
    %v1084 = vpop.f32.mrf.mxu0
    %1085 = vdwg.mxu0
    %v1086 = vadd.f32 %v1029, %v1044
    %v1087 = vadd.f32 %v1030, %v1057
    %v1088 = vadd.f32 %v1031, %v1070
    %v1089 = vadd.f32 %v1032, %v1083
    %v1090 = vxor.u32 %v1086, 2147483648
    %v1091 = vmul.f32 %v1090, 1.442695
    %v1092 = vpow.pop %v1091
    %v1093 = vadd.f32 %v1092, 1.0
    %v1094 = vrcp.pop %v1093
    %v1095 = vmul.f32 %v1093, %v1094
    %v1096 = vsub.f32 1.0, %v1095
    %v1097 = vmul.f32 %v1094, %v1096
    %v1098 = vadd.f32 %v1094, %v1097
    %vm1099 = vweird.f32 %v1093
    %vm1100 = vweird.f32 %v1094
    %vm1101 = vmor %vm1099, %vm1100
    %v1102 = vsel %vm1101, %v1094, %v1098
    %v1103 = vand.u32 2147483647, %v1093
    %vm1104 = vcmp.eq.f32.partialorder %v1103, 8.507059e+37
    %v1105 = vand.u32 %v1093, 2147483648
    %v1106 = vor.u32 1.1754944e-38, %v1105
    %v1107 = vsel %vm1104, %v1106, %v1102
    %v1108 = vmul.f32 1.0, %v1107
    %v1109 = vxor.u32 %v1087, 2147483648
    %v1110 = vmul.f32 %v1109, 1.442695
    %v1111 = vpow.pop %v1110
    %v1112 = vadd.f32 %v1111, 1.0
    %v1113 = vrcp.pop %v1112
    %v1114 = vmul.f32 %v1112, %v1113
    %v1115 = vsub.f32 1.0, %v1114
    %v1116 = vmul.f32 %v1113, %v1115
    %v1117 = vadd.f32 %v1113, %v1116
    %vm1118 = vweird.f32 %v1112
    %vm1119 = vweird.f32 %v1113
    %vm1120 = vmor %vm1118, %vm1119
    %v1121 = vsel %vm1120, %v1113, %v1117
    %v1122 = vand.u32 2147483647, %v1112
    %vm1123 = vcmp.eq.f32.partialorder %v1122, 8.507059e+37
    %v1124 = vand.u32 %v1112, 2147483648
    %v1125 = vor.u32 1.1754944e-38, %v1124
    %v1126 = vsel %vm1123, %v1125, %v1121
    %v1127 = vmul.f32 1.0, %v1126
    %v1128 = vtanh.pop %v1088
    %v1129 = vxor.u32 %v1089, 2147483648
    %v1130 = vmul.f32 %v1129, 1.442695
    %v1131 = vpow.pop %v1130
    %v1132 = vadd.f32 %v1131, 1.0
    %v1133 = vrcp.pop %v1132
    %v1134 = vmul.f32 %v1132, %v1133
    %v1135 = vsub.f32 1.0, %v1134
    %v1136 = vmul.f32 %v1133, %v1135
    %v1137 = vadd.f32 %v1133, %v1136
    %vm1138 = vweird.f32 %v1132
    %vm1139 = vweird.f32 %v1133
    %vm1140 = vmor %vm1138, %vm1139
    %v1141 = vsel %vm1140, %v1133, %v1137
    %v1142 = vand.u32 2147483647, %v1132
    %vm1143 = vcmp.eq.f32.partialorder %v1142, 8.507059e+37
    %v1144 = vand.u32 %v1132, 2147483648
    %v1145 = vor.u32 1.1754944e-38, %v1144
    %v1146 = vsel %vm1143, %v1145, %v1141
    %v1147 = vmul.f32 1.0, %v1146
    %v1148 = vmul.f32 %v1127, %v1026
    %v1149 = vmul.f32 %v1108, %v1128
    %v1150 = vadd.f32 %v1148, %v1149
    %v1151 = vtanh.pop %v1150
    %v1152 = vmul.f32 %v1147, %v1151
    %v1153 = vld [vmem:[#allocation2 + $0xa0] sm:$0xff]
    %v1154 = vld [vmem:[#allocation2 + $0xa8] sm:$0xff]
    %v1155 = vld [vmem:[#allocation2 + $0xb0] sm:$0xff]
    %v1156 = vld [vmem:[#allocation2 + $0xb8] sm:$0xff]
    %v1157 = vpack.c.bf16 %v1152, %v1152
    %1158 = vmatpush.bf16.msra.mxu0 %v502
    %1159 = vmatpush.bf16.msra.mxu0 %v498
    %1160 = vmatpush.bf16.msra.mxu0 %v494
    %1161 = vmatpush.bf16.msra.mxu0 %v490
    %1162 = vmatpush.bf16.msra.mxu0 %v486
    %1163 = vmatpush.bf16.msra.mxu0 %v482
    %1164 = vmatpush.bf16.msra.mxu0 %v478
    %1165 = vmatpush.bf16.msra.mxu0 %v474
    %1166 = vmatmul.bf16.gmra.mxu0 %v1157
    %v1167 = vpop.f32.mrf.mxu0
    %v1168 = vadd.f32 0.0, %v1167
    %v1169 = vpop.f32.mrf.mxu0
    %1170 = vdwg.mxu0
    %1171 = vmatpush.bf16.msra.mxu0 %v503
    %1172 = vmatpush.bf16.msra.mxu0 %v499
    %1173 = vmatpush.bf16.msra.mxu0 %v495
    %1174 = vmatpush.bf16.msra.mxu0 %v491
    %1175 = vmatpush.bf16.msra.mxu0 %v487
    %1176 = vmatpush.bf16.msra.mxu0 %v483
    %1177 = vmatpush.bf16.msra.mxu0 %v479
    %1178 = vmatpush.bf16.msra.mxu0 %v475
    %1179 = vmatmul.bf16.gmra.mxu0 %v1157
    %v1180 = vpop.f32.mrf.mxu0
    %v1181 = vadd.f32 0.0, %v1180
    %v1182 = vpop.f32.mrf.mxu0
    %1183 = vdwg.mxu0
    %1184 = vmatpush.bf16.msra.mxu0 %v504
    %1185 = vmatpush.bf16.msra.mxu0 %v500
    %1186 = vmatpush.bf16.msra.mxu0 %v496
    %1187 = vmatpush.bf16.msra.mxu0 %v492
    %1188 = vmatpush.bf16.msra.mxu0 %v488
    %1189 = vmatpush.bf16.msra.mxu0 %v484
    %1190 = vmatpush.bf16.msra.mxu0 %v480
    %1191 = vmatpush.bf16.msra.mxu0 %v476
    %1192 = vmatmul.bf16.gmra.mxu0 %v1157
    %v1193 = vpop.f32.mrf.mxu0
    %v1194 = vadd.f32 0.0, %v1193
    %v1195 = vpop.f32.mrf.mxu0
    %1196 = vdwg.mxu0
    %1197 = vmatpush.bf16.msra.mxu0 %v505
    %1198 = vmatpush.bf16.msra.mxu0 %v501
    %1199 = vmatpush.bf16.msra.mxu0 %v497
    %1200 = vmatpush.bf16.msra.mxu0 %v493
    %1201 = vmatpush.bf16.msra.mxu0 %v489
    %1202 = vmatpush.bf16.msra.mxu0 %v485
    %1203 = vmatpush.bf16.msra.mxu0 %v481
    %1204 = vmatpush.bf16.msra.mxu0 %v477
    %1205 = vmatmul.bf16.gmra.mxu0 %v1157
    %v1206 = vpop.f32.mrf.mxu0
    %v1207 = vadd.f32 0.0, %v1206
    %v1208 = vpop.f32.mrf.mxu0
    %1209 = vdwg.mxu0
    %v1210 = vadd.f32 %v1153, %v1168
    %v1211 = vadd.f32 %v1154, %v1181
    %v1212 = vadd.f32 %v1155, %v1194
    %v1213 = vadd.f32 %v1156, %v1207
    %v1214 = vxor.u32 %v1210, 2147483648
    %v1215 = vmul.f32 %v1214, 1.442695
    %v1216 = vpow.pop %v1215
    %v1217 = vadd.f32 %v1216, 1.0
    %v1218 = vrcp.pop %v1217
    %v1219 = vmul.f32 %v1217, %v1218
    %v1220 = vsub.f32 1.0, %v1219
    %v1221 = vmul.f32 %v1218, %v1220
    %v1222 = vadd.f32 %v1218, %v1221
    %vm1223 = vweird.f32 %v1217
    %vm1224 = vweird.f32 %v1218
    %vm1225 = vmor %vm1223, %vm1224
    %v1226 = vsel %vm1225, %v1218, %v1222
    %v1227 = vand.u32 2147483647, %v1217
    %vm1228 = vcmp.eq.f32.partialorder %v1227, 8.507059e+37
    %v1229 = vand.u32 %v1217, 2147483648
    %v1230 = vor.u32 1.1754944e-38, %v1229
    %v1231 = vsel %vm1228, %v1230, %v1226
    %v1232 = vmul.f32 1.0, %v1231
    %v1233 = vxor.u32 %v1211, 2147483648
    %v1234 = vmul.f32 %v1233, 1.442695
    %v1235 = vpow.pop %v1234
    %v1236 = vadd.f32 %v1235, 1.0
    %v1237 = vrcp.pop %v1236
    %v1238 = vmul.f32 %v1236, %v1237
    %v1239 = vsub.f32 1.0, %v1238
    %v1240 = vmul.f32 %v1237, %v1239
    %v1241 = vadd.f32 %v1237, %v1240
    %vm1242 = vweird.f32 %v1236
    %vm1243 = vweird.f32 %v1237
    %vm1244 = vmor %vm1242, %vm1243
    %v1245 = vsel %vm1244, %v1237, %v1241
    %v1246 = vand.u32 2147483647, %v1236
    %vm1247 = vcmp.eq.f32.partialorder %v1246, 8.507059e+37
    %v1248 = vand.u32 %v1236, 2147483648
    %v1249 = vor.u32 1.1754944e-38, %v1248
    %v1250 = vsel %vm1247, %v1249, %v1245
    %v1251 = vmul.f32 1.0, %v1250
    %v1252 = vtanh.pop %v1212
    %v1253 = vxor.u32 %v1213, 2147483648
    %v1254 = vmul.f32 %v1253, 1.442695
    %v1255 = vpow.pop %v1254
    %v1256 = vadd.f32 %v1255, 1.0
    %v1257 = vrcp.pop %v1256
    %v1258 = vmul.f32 %v1256, %v1257
    %v1259 = vsub.f32 1.0, %v1258
    %v1260 = vmul.f32 %v1257, %v1259
    %v1261 = vadd.f32 %v1257, %v1260
    %vm1262 = vweird.f32 %v1256
    %vm1263 = vweird.f32 %v1257
    %vm1264 = vmor %vm1262, %vm1263
    %v1265 = vsel %vm1264, %v1257, %v1261
    %v1266 = vand.u32 2147483647, %v1256
    %vm1267 = vcmp.eq.f32.partialorder %v1266, 8.507059e+37
    %v1268 = vand.u32 %v1256, 2147483648
    %v1269 = vor.u32 1.1754944e-38, %v1268
    %v1270 = vsel %vm1267, %v1269, %v1265
    %v1271 = vmul.f32 1.0, %v1270
    %v1272 = vmul.f32 %v1251, %v1150
    %v1273 = vmul.f32 %v1232, %v1252
    %v1274 = vadd.f32 %v1272, %v1273
    %v1275 = vtanh.pop %v1274
    %v1276 = vmul.f32 %v1271, %v1275
    %v1277 = vld [vmem:[#allocation2 + $0xc0] sm:$0xff]
    %v1278 = vld [vmem:[#allocation2 + $0xc8] sm:$0xff]
    %v1279 = vld [vmem:[#allocation2 + $0xd0] sm:$0xff]
    %v1280 = vld [vmem:[#allocation2 + $0xd8] sm:$0xff]
    %v1281 = vpack.c.bf16 %v1276, %v1276
    %1282 = vmatpush.bf16.msra.mxu0 %v502
    %1283 = vmatpush.bf16.msra.mxu0 %v498
    %1284 = vmatpush.bf16.msra.mxu0 %v494
    %1285 = vmatpush.bf16.msra.mxu0 %v490
    %1286 = vmatpush.bf16.msra.mxu0 %v486
    %1287 = vmatpush.bf16.msra.mxu0 %v482
    %1288 = vmatpush.bf16.msra.mxu0 %v478
    %1289 = vmatpush.bf16.msra.mxu0 %v474
    %1290 = vmatmul.bf16.gmra.mxu0 %v1281
    %v1291 = vpop.f32.mrf.mxu0
    %v1292 = vadd.f32 0.0, %v1291
    %v1293 = vpop.f32.mrf.mxu0
    %1294 = vdwg.mxu0
    %1295 = vmatpush.bf16.msra.mxu0 %v503
    %1296 = vmatpush.bf16.msra.mxu0 %v499
    %1297 = vmatpush.bf16.msra.mxu0 %v495
    %1298 = vmatpush.bf16.msra.mxu0 %v491
    %1299 = vmatpush.bf16.msra.mxu0 %v487
    %1300 = vmatpush.bf16.msra.mxu0 %v483
    %1301 = vmatpush.bf16.msra.mxu0 %v479
    %1302 = vmatpush.bf16.msra.mxu0 %v475
    %1303 = vmatmul.bf16.gmra.mxu0 %v1281
    %v1304 = vpop.f32.mrf.mxu0
    %v1305 = vadd.f32 0.0, %v1304
    %v1306 = vpop.f32.mrf.mxu0
    %1307 = vdwg.mxu0
    %1308 = vmatpush.bf16.msra.mxu0 %v504
    %1309 = vmatpush.bf16.msra.mxu0 %v500
    %1310 = vmatpush.bf16.msra.mxu0 %v496
    %1311 = vmatpush.bf16.msra.mxu0 %v492
    %1312 = vmatpush.bf16.msra.mxu0 %v488
    %1313 = vmatpush.bf16.msra.mxu0 %v484
    %1314 = vmatpush.bf16.msra.mxu0 %v480
    %1315 = vmatpush.bf16.msra.mxu0 %v476
    %1316 = vmatmul.bf16.gmra.mxu0 %v1281
    %v1317 = vpop.f32.mrf.mxu0
    %v1318 = vadd.f32 0.0, %v1317
    %v1319 = vpop.f32.mrf.mxu0
    %1320 = vdwg.mxu0
    %1321 = vmatpush.bf16.msra.mxu0 %v505
    %1322 = vmatpush.bf16.msra.mxu0 %v501
    %1323 = vmatpush.bf16.msra.mxu0 %v497
    %1324 = vmatpush.bf16.msra.mxu0 %v493
    %1325 = vmatpush.bf16.msra.mxu0 %v489
    %1326 = vmatpush.bf16.msra.mxu0 %v485
    %1327 = vmatpush.bf16.msra.mxu0 %v481
    %1328 = vmatpush.bf16.msra.mxu0 %v477
    %1329 = vmatmul.bf16.gmra.mxu0 %v1281
    %v1330 = vpop.f32.mrf.mxu0
    %v1331 = vadd.f32 0.0, %v1330
    %v1332 = vpop.f32.mrf.mxu0
    %1333 = vdwg.mxu0
    %v1334 = vadd.f32 %v1277, %v1292
    %v1335 = vadd.f32 %v1278, %v1305
    %v1336 = vadd.f32 %v1279, %v1318
    %v1337 = vadd.f32 %v1280, %v1331
    %v1338 = vxor.u32 %v1334, 2147483648
    %v1339 = vmul.f32 %v1338, 1.442695
    %v1340 = vpow.pop %v1339
    %v1341 = vadd.f32 %v1340, 1.0
    %v1342 = vrcp.pop %v1341
    %v1343 = vmul.f32 %v1341, %v1342
    %v1344 = vsub.f32 1.0, %v1343
    %v1345 = vmul.f32 %v1342, %v1344
    %v1346 = vadd.f32 %v1342, %v1345
    %vm1347 = vweird.f32 %v1341
    %vm1348 = vweird.f32 %v1342
    %vm1349 = vmor %vm1347, %vm1348
    %v1350 = vsel %vm1349, %v1342, %v1346
    %v1351 = vand.u32 2147483647, %v1341
    %vm1352 = vcmp.eq.f32.partialorder %v1351, 8.507059e+37
    %v1353 = vand.u32 %v1341, 2147483648
    %v1354 = vor.u32 1.1754944e-38, %v1353
    %v1355 = vsel %vm1352, %v1354, %v1350
    %v1356 = vmul.f32 1.0, %v1355
    %v1357 = vxor.u32 %v1335, 2147483648
    %v1358 = vmul.f32 %v1357, 1.442695
    %v1359 = vpow.pop %v1358
    %v1360 = vadd.f32 %v1359, 1.0
    %v1361 = vrcp.pop %v1360
    %v1362 = vmul.f32 %v1360, %v1361
    %v1363 = vsub.f32 1.0, %v1362
    %v1364 = vmul.f32 %v1361, %v1363
    %v1365 = vadd.f32 %v1361, %v1364
    %vm1366 = vweird.f32 %v1360
    %vm1367 = vweird.f32 %v1361
    %vm1368 = vmor %vm1366, %vm1367
    %v1369 = vsel %vm1368, %v1361, %v1365
    %v1370 = vand.u32 2147483647, %v1360
    %vm1371 = vcmp.eq.f32.partialorder %v1370, 8.507059e+37
    %v1372 = vand.u32 %v1360, 2147483648
    %v1373 = vor.u32 1.1754944e-38, %v1372
    %v1374 = vsel %vm1371, %v1373, %v1369
    %v1375 = vmul.f32 1.0, %v1374
    %v1376 = vtanh.pop %v1336
    %v1377 = vxor.u32 %v1337, 2147483648
    %v1378 = vmul.f32 %v1377, 1.442695
    %v1379 = vpow.pop %v1378
    %v1380 = vadd.f32 %v1379, 1.0
    %v1381 = vrcp.pop %v1380
    %v1382 = vmul.f32 %v1380, %v1381
    %v1383 = vsub.f32 1.0, %v1382
    %v1384 = vmul.f32 %v1381, %v1383
    %v1385 = vadd.f32 %v1381, %v1384
    %vm1386 = vweird.f32 %v1380
    %vm1387 = vweird.f32 %v1381
    %vm1388 = vmor %vm1386, %vm1387
    %v1389 = vsel %vm1388, %v1381, %v1385
    %v1390 = vand.u32 2147483647, %v1380
    %vm1391 = vcmp.eq.f32.partialorder %v1390, 8.507059e+37
    %v1392 = vand.u32 %v1380, 2147483648
    %v1393 = vor.u32 1.1754944e-38, %v1392
    %v1394 = vsel %vm1391, %v1393, %v1389
    %v1395 = vmul.f32 1.0, %v1394
    %v1396 = vmul.f32 %v1375, %v1274
    %v1397 = vmul.f32 %v1356, %v1376
    %v1398 = vadd.f32 %v1396, %v1397
    %v1399 = vtanh.pop %v1398
    %v1400 = vmul.f32 %v1395, %v1399
    %v1401 = vld [vmem:[#allocation2 + $0xe0] sm:$0xff]
    %v1402 = vld [vmem:[#allocation2 + $0xe8] sm:$0xff]
    %v1403 = vld [vmem:[#allocation2 + $0xf0] sm:$0xff]
    %v1404 = vld [vmem:[#allocation2 + $0xf8] sm:$0xff]
    %v1405 = vpack.c.bf16 %v1400, %v1400
    %1406 = vmatpush.bf16.msra.mxu0 %v502
    %1407 = vmatpush.bf16.msra.mxu0 %v498
    %1408 = vmatpush.bf16.msra.mxu0 %v494
    %1409 = vmatpush.bf16.msra.mxu0 %v490
    %1410 = vmatpush.bf16.msra.mxu0 %v486
    %1411 = vmatpush.bf16.msra.mxu0 %v482
    %1412 = vmatpush.bf16.msra.mxu0 %v478
    %1413 = vmatpush.bf16.msra.mxu0 %v474
    %1414 = vmatmul.bf16.gmra.mxu0 %v1405
    %v1415 = vpop.f32.mrf.mxu0
    %v1416 = vadd.f32 0.0, %v1415
    %v1417 = vpop.f32.mrf.mxu0
    %1418 = vdwg.mxu0
    %1419 = vmatpush.bf16.msra.mxu0 %v503
    %1420 = vmatpush.bf16.msra.mxu0 %v499
    %1421 = vmatpush.bf16.msra.mxu0 %v495
    %1422 = vmatpush.bf16.msra.mxu0 %v491
    %1423 = vmatpush.bf16.msra.mxu0 %v487
    %1424 = vmatpush.bf16.msra.mxu0 %v483
    %1425 = vmatpush.bf16.msra.mxu0 %v479
    %1426 = vmatpush.bf16.msra.mxu0 %v475
    %1427 = vmatmul.bf16.gmra.mxu0 %v1405
    %v1428 = vpop.f32.mrf.mxu0
    %v1429 = vadd.f32 0.0, %v1428
    %v1430 = vpop.f32.mrf.mxu0
    %1431 = vdwg.mxu0
    %1432 = vmatpush.bf16.msra.mxu0 %v504
    %1433 = vmatpush.bf16.msra.mxu0 %v500
    %1434 = vmatpush.bf16.msra.mxu0 %v496
    %1435 = vmatpush.bf16.msra.mxu0 %v492
    %1436 = vmatpush.bf16.msra.mxu0 %v488
    %1437 = vmatpush.bf16.msra.mxu0 %v484
    %1438 = vmatpush.bf16.msra.mxu0 %v480
    %1439 = vmatpush.bf16.msra.mxu0 %v476
    %1440 = vmatmul.bf16.gmra.mxu0 %v1405
    %v1441 = vpop.f32.mrf.mxu0
    %v1442 = vadd.f32 0.0, %v1441
    %v1443 = vpop.f32.mrf.mxu0
    %1444 = vdwg.mxu0
    %1445 = vmatpush.bf16.msra.mxu0 %v505
    %1446 = vmatpush.bf16.msra.mxu0 %v501
    %1447 = vmatpush.bf16.msra.mxu0 %v497
    %1448 = vmatpush.bf16.msra.mxu0 %v493
    %1449 = vmatpush.bf16.msra.mxu0 %v489
    %1450 = vmatpush.bf16.msra.mxu0 %v485
    %1451 = vmatpush.bf16.msra.mxu0 %v481
    %1452 = vmatpush.bf16.msra.mxu0 %v477
    %1453 = vmatmul.bf16.gmra.mxu0 %v1405
    %v1454 = vpop.f32.mrf.mxu0
    %v1455 = vadd.f32 0.0, %v1454
    %v1456 = vpop.f32.mrf.mxu0
    %1457 = vdwg.mxu0
    %v1458 = vadd.f32 %v1401, %v1416
    %v1459 = vadd.f32 %v1402, %v1429
    %v1460 = vadd.f32 %v1403, %v1442
    %v1461 = vadd.f32 %v1404, %v1455
    %v1462 = vxor.u32 %v1458, 2147483648
    %v1463 = vmul.f32 %v1462, 1.442695
    %v1464 = vpow.pop %v1463
    %v1465 = vadd.f32 %v1464, 1.0
    %v1466 = vrcp.pop %v1465
    %v1467 = vmul.f32 %v1465, %v1466
    %v1468 = vsub.f32 1.0, %v1467
    %v1469 = vmul.f32 %v1466, %v1468
    %v1470 = vadd.f32 %v1466, %v1469
    %vm1471 = vweird.f32 %v1465
    %vm1472 = vweird.f32 %v1466
    %vm1473 = vmor %vm1471, %vm1472
    %v1474 = vsel %vm1473, %v1466, %v1470
    %v1475 = vand.u32 2147483647, %v1465
    %vm1476 = vcmp.eq.f32.partialorder %v1475, 8.507059e+37
    %v1477 = vand.u32 %v1465, 2147483648
    %v1478 = vor.u32 1.1754944e-38, %v1477
    %v1479 = vsel %vm1476, %v1478, %v1474
    %v1480 = vmul.f32 1.0, %v1479
    %v1481 = vxor.u32 %v1459, 2147483648
    %v1482 = vmul.f32 %v1481, 1.442695
    %v1483 = vpow.pop %v1482
    %v1484 = vadd.f32 %v1483, 1.0
    %v1485 = vrcp.pop %v1484
    %v1486 = vmul.f32 %v1484, %v1485
    %v1487 = vsub.f32 1.0, %v1486
    %v1488 = vmul.f32 %v1485, %v1487
    %v1489 = vadd.f32 %v1485, %v1488
    %vm1490 = vweird.f32 %v1484
    %vm1491 = vweird.f32 %v1485
    %vm1492 = vmor %vm1490, %vm1491
    %v1493 = vsel %vm1492, %v1485, %v1489
    %v1494 = vand.u32 2147483647, %v1484
    %vm1495 = vcmp.eq.f32.partialorder %v1494, 8.507059e+37
    %v1496 = vand.u32 %v1484, 2147483648
    %v1497 = vor.u32 1.1754944e-38, %v1496
    %v1498 = vsel %vm1495, %v1497, %v1493
    %v1499 = vmul.f32 1.0, %v1498
    %v1500 = vtanh.pop %v1460
    %v1501 = vxor.u32 %v1461, 2147483648
    %v1502 = vmul.f32 %v1501, 1.442695
    %v1503 = vpow.pop %v1502
    %v1504 = vadd.f32 %v1503, 1.0
    %v1505 = vrcp.pop %v1504
    %v1506 = vmul.f32 %v1504, %v1505
    %v1507 = vsub.f32 1.0, %v1506
    %v1508 = vmul.f32 %v1505, %v1507
    %v1509 = vadd.f32 %v1505, %v1508
    %vm1510 = vweird.f32 %v1504
    %vm1511 = vweird.f32 %v1505
    %vm1512 = vmor %vm1510, %vm1511
    %v1513 = vsel %vm1512, %v1505, %v1509
    %v1514 = vand.u32 2147483647, %v1504
    %vm1515 = vcmp.eq.f32.partialorder %v1514, 8.507059e+37
    %v1516 = vand.u32 %v1504, 2147483648
    %v1517 = vor.u32 1.1754944e-38, %v1516
    %v1518 = vsel %vm1515, %v1517, %v1513
    %v1519 = vmul.f32 1.0, %v1518
    %v1520 = vmul.f32 %v1499, %v1398
    %v1521 = vmul.f32 %v1480, %v1500
    %v1522 = vadd.f32 %v1520, %v1521
    %v1523 = vtanh.pop %v1522
    %v1524 = vmul.f32 %v1519, %v1523
    %v1525 = vld [vmem:[#allocation3 + $0x40] sm:$0xff]
    %v1526 = vld [vmem:[#allocation3 + $0x48] sm:$0xff]
    %v1527 = vld [vmem:[#allocation3 + $0x50] sm:$0xff]
    %v1528 = vld [vmem:[#allocation3 + $0x58] sm:$0xff]
    %v1529 = vld [vmem:[#allocation3 + $0x60] sm:$0xff]
    %v1530 = vld [vmem:[#allocation3 + $0x68] sm:$0xff]
    %v1531 = vld [vmem:[#allocation3 + $0x70] sm:$0xff]
    %v1532 = vld [vmem:[#allocation3 + $0x78] sm:$0xff]
    %v1533 = vld [vmem:[#allocation3 + $0x80] sm:$0xff]
    %v1534 = vld [vmem:[#allocation3 + $0x88] sm:$0xff]
    %v1535 = vld [vmem:[#allocation3 + $0x90] sm:$0xff]
    %v1536 = vld [vmem:[#allocation3 + $0x98] sm:$0xff]
    %v1537 = vld [vmem:[#allocation3 + $0xa0] sm:$0xff]
    %v1538 = vld [vmem:[#allocation3 + $0xa8] sm:$0xff]
    %v1539 = vld [vmem:[#allocation3 + $0xb0] sm:$0xff]
    %v1540 = vld [vmem:[#allocation3 + $0xb8] sm:$0xff]
    %v1541 = vld [vmem:[#allocation3 + $0xc0] sm:$0xff]
    %v1542 = vld [vmem:[#allocation3 + $0xc8] sm:$0xff]
    %v1543 = vld [vmem:[#allocation3 + $0xd0] sm:$0xff]
    %v1544 = vld [vmem:[#allocation3 + $0xd8] sm:$0xff]
    %v1545 = vld [vmem:[#allocation3 + $0xe0] sm:$0xff]
    %v1546 = vld [vmem:[#allocation3 + $0xe8] sm:$0xff]
    %v1547 = vld [vmem:[#allocation3 + $0xf0] sm:$0xff]
    %v1548 = vld [vmem:[#allocation3 + $0xf8] sm:$0xff]
    %v1549 = vld [vmem:[#allocation3 + $0x100] sm:$0xff]
    %v1550 = vld [vmem:[#allocation3 + $0x108] sm:$0xff]
    %v1551 = vld [vmem:[#allocation3 + $0x110] sm:$0xff]
    %v1552 = vld [vmem:[#allocation3 + $0x118] sm:$0xff]
    %v1553 = vld [vmem:[#allocation3 + $0x120] sm:$0xff]
    %v1554 = vld [vmem:[#allocation3 + $0x128] sm:$0xff]
    %v1555 = vld [vmem:[#allocation3 + $0x130] sm:$0xff]
    %v1556 = vld [vmem:[#allocation3 + $0x138] sm:$0xff]
    %v1557 = vld [vmem:[#allocation3 + $0x140] sm:$0x1]
    %v1558 = vld [vmem:[#allocation3 + $0x148] sm:$0x1]
    %v1559 = vperm.slane %v1557, 0
    %1560 = vmatpush.msra.mxu0 %v1540
    %1561 = vmatpush.msra.mxu0 %v1539
    %1562 = vmatpush.msra.mxu0 %v1538
    %1563 = vmatpush.msra.mxu0 %v1537
    %1564 = vmatpush.msra.mxu0 %v1536
    %1565 = vmatpush.msra.mxu0 %v1535
    %1566 = vmatpush.msra.mxu0 %v1534
    %1567 = vmatpush.msra.mxu0 %v1533
    %1568 = vmatpush.msra.mxu0 %v1532
    %1569 = vmatpush.msra.mxu0 %v1531
    %1570 = vmatpush.msra.mxu0 %v1530
    %1571 = vmatpush.msra.mxu0 %v1529
    %1572 = vmatpush.msra.mxu0 %v1528
    %1573 = vmatpush.msra.mxu0 %v1527
    %1574 = vmatpush.msra.mxu0 %v1526
    %1575 = vmatpush.msra.mxu0 %v1525
    %1576 = vmatmul.f32.gmra.mxu0 %v656
    %v1577 = vpop.f32.mrf.mxu0
    %v1578 = vadd.f32 %v1559, %v1577
    %1579 = vmatmul.f32.gmra.mxu0 %v780
    %v1580 = vpop.f32.mrf.mxu0
    %v1581 = vadd.f32 %v1559, %v1580
    %1582 = vmatmul.f32.gmra.mxu0 %v904
    %v1583 = vpop.f32.mrf.mxu0
    %v1584 = vadd.f32 %v1559, %v1583
    %1585 = vmatmul.f32.gmra.mxu0 %v1028
    %v1586 = vpop.f32.mrf.mxu0
    %v1587 = vadd.f32 %v1559, %v1586
    %1588 = vmatmul.f32.gmra.mxu0 %v1152
    %v1589 = vpop.f32.mrf.mxu0
    %v1590 = vadd.f32 %v1559, %v1589
    %1591 = vmatmul.f32.gmra.mxu0 %v1276
    %v1592 = vpop.f32.mrf.mxu0
    %v1593 = vadd.f32 %v1559, %v1592
    %1594 = vmatmul.f32.gmra.mxu0 %v1400
    %v1595 = vpop.f32.mrf.mxu0
    %v1596 = vadd.f32 %v1559, %v1595
    %1597 = vmatmul.f32.gmra.mxu0 %v1524
    %v1598 = vpop.f32.mrf.mxu0
    %v1599 = vadd.f32 %v1559, %v1598
    %1600 = vdwg.mxu0
    %v1601 = vmax.f32 %v1578, 0.0
    %v1602 = vmax.f32 %v1581, 0.0
    %v1603 = vmax.f32 %v1584, 0.0
    %v1604 = vmax.f32 %v1587, 0.0
    %v1605 = vmax.f32 %v1590, 0.0
    %v1606 = vmax.f32 %v1593, 0.0
    %v1607 = vmax.f32 %v1596, 0.0
    %v1608 = vmax.f32 %v1599, 0.0
    %v1609 = vperm.slane %v1558, 0
    %1610 = vmatpush.msra.mxu0 %v1556
    %1611 = vmatpush.msra.mxu0 %v1555
    %1612 = vmatpush.msra.mxu0 %v1554
    %1613 = vmatpush.msra.mxu0 %v1553
    %1614 = vmatpush.msra.mxu0 %v1552
    %1615 = vmatpush.msra.mxu0 %v1551
    %1616 = vmatpush.msra.mxu0 %v1550
    %1617 = vmatpush.msra.mxu0 %v1549
    %1618 = vmatpush.msra.mxu0 %v1548
    %1619 = vmatpush.msra.mxu0 %v1547
    %1620 = vmatpush.msra.mxu0 %v1546
    %1621 = vmatpush.msra.mxu0 %v1545
    %1622 = vmatpush.msra.mxu0 %v1544
    %1623 = vmatpush.msra.mxu0 %v1543
    %1624 = vmatpush.msra.mxu0 %v1542
    %1625 = vmatpush.msra.mxu0 %v1541
    %1626 = vmatmul.f32.gmra.mxu0 %v1601
    %v1627 = vpop.f32.mrf.mxu0
    %v1628 = vadd.f32 %v1609, %v1627
    %1629 = vmatmul.f32.gmra.mxu0 %v1602
    %v1630 = vpop.f32.mrf.mxu0
    %v1631 = vadd.f32 %v1609, %v1630
    %1632 = vmatmul.f32.gmra.mxu0 %v1603
    %v1633 = vpop.f32.mrf.mxu0
    %v1634 = vadd.f32 %v1609, %v1633
    %1635 = vmatmul.f32.gmra.mxu0 %v1604
    %v1636 = vpop.f32.mrf.mxu0
    %v1637 = vadd.f32 %v1609, %v1636
    %1638 = vmatmul.f32.gmra.mxu0 %v1605
    %v1639 = vpop.f32.mrf.mxu0
    %v1640 = vadd.f32 %v1609, %v1639
    %1641 = vmatmul.f32.gmra.mxu0 %v1606
    %v1642 = vpop.f32.mrf.mxu0
    %v1643 = vadd.f32 %v1609, %v1642
    %1644 = vmatmul.f32.gmra.mxu0 %v1607
    %v1645 = vpop.f32.mrf.mxu0
    %v1646 = vadd.f32 %v1609, %v1645
    %1647 = vmatmul.f32.gmra.mxu0 %v1608
    %v1648 = vpop.f32.mrf.mxu0
    %v1649 = vadd.f32 %v1609, %v1648
    %1650 = vdwg.mxu0
    %v1651 = vtanh.pop %v1628
    %v1652 = vtanh.pop %v1631
    %v1653 = vtanh.pop %v1634
    %v1654 = vtanh.pop %v1637
    %v1655 = vtanh.pop %v1640
    %v1656 = vtanh.pop %v1643
    %v1657 = vtanh.pop %v1646
    %v1658 = vtanh.pop %v1649
    %1659 = vst [vmem:[#allocation9] sm:$0xff] %v1651
    %1660 = vst [vmem:[#allocation9 + $0x8] sm:$0xff] %v1652
    %1661 = vst [vmem:[#allocation9 + $0x10] sm:$0xff] %v1653
    %1662 = vst [vmem:[#allocation9 + $0x18] sm:$0xff] %v1654
    %1663 = vst [vmem:[#allocation9 + $0x20] sm:$0xff] %v1655
    %1664 = vst [vmem:[#allocation9 + $0x28] sm:$0xff] %v1656
    %1665 = vst [vmem:[#allocation9 + $0x30] sm:$0xff] %v1657
    %1666 = vst [vmem:[#allocation9 + $0x38] sm:$0xff] %v1658
    // Predicated region
    $region26: #{tpu_custom_call.1} parent=1 // pred_check
      _
    $region27: #{tpu_custom_call.1} parent=1 // pred_check_branch
      %1668 = sbr.rel (0) target = $region29
    $region28: #{tpu_custom_call.1} parent=1 // pred_region
      %1670 = vsyncadd [#allocation5], 0
      %s1671 = sshll.u32 [#allocation9], 4
      %s1672 = int_to_ptr.vmem [resolvable:$true] %s1671
      %s1673 = sshll.u32 %s3, 4
      %s1674 = int_to_ptr.hbm [resolvable:$true] %s1673
      %1679 = dma.vmem_to_hbm [thread:$0]  %s1672, 1024, %s1674, [#allocation5], 128, 128, 8
    $region29: #{tpu_custom_call.1} parent=1 // pred_fallthru
      _
    // Predicated region
    $region30: #{tpu_custom_call.1} parent=1 // pred_check
      _
    $region31: #{tpu_custom_call.1} parent=1 // pred_check_branch
      %1681 = sbr.rel (0) target = $region33
    $region32: #{tpu_custom_call.1} parent=1 // pred_region
      %1683 = dma.done [#allocation5], 1024
    $region33: #{tpu_custom_call.1} parent=1 // pred_fallthru
      _
    %1684 = vsyncpa [#allocation4], 1
    %1685 = vsyncpa [#allocation7], 1
    %1686 = vsyncpa [#allocation5], 1

</llo_original>
